<compile_context>
chip_gen: v6e
topology: v6e:2x2x1
jax: 0.10.0
libtpu: 0.0.40
codegen_flags: <defaults>
</compile_context>

<pallas_src>
import math
from functools import partial

import numpy as np
import jax
import jax.numpy as jnp
from jax.experimental import pallas as pl
from jax.experimental.pallas import tpu as pltpu

# ----------------------------- configuration --------------------------------
B = 2            # batch
T = 8            # sequence length
E = 32           # embedding_dim
H = 32           # hidden_size
NB = 4           # n_bases
NB1 = NB + 1
K = 4            # n_types
O = E * NB1      # shallow_net output dim (=160)
NBK = NB1 * K    # packed log-basis-weight columns (=20), basis-major
OUT_PAD = 128    # lane-dense kernel output width: [lbw (20) | li (4) | pad]
MAX_MEAN = 3.0
# basis_type='equal' (the module default 'normal' raises ValueError in __init__)
LOC = tuple(i * MAX_MEAN / (NB - 1) for i in range(NB))
SCALE = tuple(MAX_MEAN / (NB - 1) for _ in range(NB))


def _basis_rows():
    """(1, NB1*K) constant rows (Unity block = zeros) + basis-group selector."""
    inv = np.zeros((1, NBK), np.float32)
    locinv = np.zeros((1, NBK), np.float32)
    logc = np.zeros((1, NBK), np.float32)
    for j in range(1, NB1):
        inv[0, j * K:(j + 1) * K] = 1.0 / SCALE[j - 1]
        locinv[0, j * K:(j + 1) * K] = LOC[j - 1] / SCALE[j - 1]
        logc[0, j * K:(j + 1) * K] = -math.log(SCALE[j - 1]) - 0.5 * math.log(2.0 * math.pi)
    sel = np.zeros((NBK, K), np.float32)
    for j in range(NB1):
        for k in range(K):
            sel[j * K + k, k] = 1.0
    return inv, locinv, logc, sel


_INV_ROW, _LOCINV_ROW, _LOGC_ROW, _SEL = _basis_rows()


# ------------------------------- Pallas kernel -------------------------------
def _erpp_kernel(feat_ref, dt1_ref,
                 wih_ref, bihf_ref, whh_ref, bhhn_ref,
                 w1a_ref, b1a_ref, wcat_ref, be_ref,
                 inv_ref, locinv_ref, logc_ref, sel_ref,
                 out_ref, xhist_ref,
                 *, batch, hidden, n_types):
    TB = feat_ref.shape[0]
    Bn, Hn, Kn = batch, hidden, n_types
    Tn = TB // Bn
    nbk = wcat_ref.shape[1]

    # ---------------- GRU (batch_first, h0 = 0), whole batch ----------------
    # Input-gate contribution for every (t, b) in ONE hoisted MXU call.
    gi = jnp.dot(feat_ref[...], wih_ref[...],
                 preferred_element_type=jnp.float32) + bihf_ref[...]      # (TB, 3H)
    whh = whh_ref[...]                                                    # (H, 3H)
    bhhn = bhhn_ref[...]                                                  # (1, H) n-gate only

    h = jnp.zeros((Bn, Hn), jnp.float32)
    for t in range(Tn):                       # fully unrolled: T static & small
        gh = jnp.dot(h, whh, preferred_element_type=jnp.float32)         # (B, 3H)
        g = gi[t * Bn:(t + 1) * Bn, :]                                    # (B, 3H) contiguous rows
        r = jax.nn.sigmoid(g[:, :Hn] + gh[:, :Hn])
        z = jax.nn.sigmoid(g[:, Hn:2 * Hn] + gh[:, Hn:2 * Hn])
        n = jnp.tanh(g[:, 2 * Hn:] + r * (gh[:, 2 * Hn:] + bhhn))
        h = (1.0 - z) * n + z * h
        xhist_ref[t * Bn:(t + 1) * Bn, :] = h                             # history row-block

    X = xhist_ref[...]                                                    # (TB, H)

    # ------------- shallow_net (+ folded type embedding), 2 matmuls ---------
    # TODO(synk): ResidualLayer assumed = Linear(H,O)->ReLU->Linear(O,O) + Linear(H,O) skip.
    pre = jnp.dot(X, w1a_ref[...], preferred_element_type=jnp.float32) + b1a_ref[...]  # (TB, O+H)
    ncat = pre.shape[-1]
    col = jax.lax.broadcasted_iota(jnp.int32, (TB, ncat), 1)
    cat = jnp.where(col < ncat - Hn, jnp.maximum(pre, 0.0), pre)          # relu on w1 part only
    lbw = jnp.dot(cat, wcat_ref[...],
                  preferred_element_type=jnp.float32) + be_ref[...]       # (TB, NB1*K)

    # ------------- dense basis log-probs + logsumexp over bases -------------
    # TODO(synk): Unity.log_prob assumed == 0 everywhere (its columns in the const rows are 0).
    dt = dt1_ref[...]                                                     # (TB, 1)
    zb = dt * inv_ref[...] - locinv_ref[...]                              # (TB, NB1*K)
    term = lbw + (logc_ref[...] - 0.5 * zb * zb)                          # one full-width pass
    m = jnp.max(term, axis=-1, keepdims=True)                             # shared stabiliser
    p = jnp.exp(term - m)                                                 # ONE EUP pass
    s = jnp.dot(p, sel_ref[...], preferred_element_type=jnp.float32)      # K-strided group sum
    li = jnp.log(s) + m                                                   # (TB, K)

    # single lane-dense store: [ lbw | li | zero pad ]
    pad = jnp.zeros((TB, out_ref.shape[1] - nbk - Kn), jnp.float32)
    out_ref[...] = jnp.concatenate([lbw, li, pad], axis=-1)


# ------------------------------- wrapper -------------------------------------
def build_feat(event_seqs, emb_KE):
    """Glue: dt computation, padding and embedding lookup (category mode)."""
    ts = event_seqs[:, :, 0]
    types = event_seqs[:, :, 1].astype(jnp.int32)
    ts_pad = jnp.pad(ts, ((0, 0), (1, 0)))                                # (B, T+1)
    dt_full = jnp.pad(ts_pad[:, 1:] - ts_pad[:, :-1], ((0, 0), (1, 0)))   # (B, T+1)
    temp_feat = dt_full[:, :-1][..., None]                                # (B, T, 1)
    dt1 = dt_full[:, 1:]                                                  # (B, T)
    type_emb = emb_KE[types]                                              # (B, T, E)
    type_feat = jnp.pad(type_emb[:, :-1, :], ((0, 0), (1, 0), (0, 0)))
    feat = jnp.concatenate([temp_feat, type_feat], axis=-1)               # (B, T, 1+E)
    return feat, dt1


@jax.jit
def erpp_forward(event_seqs, params):
    feat, dt1 = build_feat(event_seqs, params['emb_KE'])
    Bn, Tn, Fd = feat.shape
    TB = Bn * Tn

    # time-major flattening: row = t*B + b (per-step gate rows are contiguous)
    feat_tm = jnp.swapaxes(feat, 0, 1).reshape(TB, Fd).astype(jnp.float32)
    dt1_tm = jnp.swapaxes(dt1, 0, 1).reshape(TB, 1).astype(jnp.float32)

    # ---- trace-time weight packing / folding --------------------------------
    wih, whh = params['wih'], params['whh']
    bih, bhh = params['bih'], params['bhh']
    wih_all = jnp.concatenate([wih[0], wih[1], wih[2]], axis=1)           # (1+E, 3H)
    whh_all = jnp.concatenate([whh[0], whh[1], whh[2]], axis=1)           # (H, 3H)
    # bih + bhh pre-summed for r/z; n-gate keeps bhh inside r * (.)
    bih_fold = jnp.concatenate([bih[0] + bhh[0], bih[1] + bhh[1], bih[2]], axis=1)  # (1, 3H)
    bhh_n = bhh[2]                                                        # (1, H)

    # first layer augmented with identity so [h1 | X] comes out of ONE matmul
    w1a = jnp.concatenate([params['w1'], jnp.eye(H, dtype=jnp.float32)], axis=1)    # (H, O+H)
    b1a = jnp.concatenate([params['b1'], jnp.zeros((1, H), jnp.float32)], axis=1)   # (1, O+H)

    # type embedding folded into second-layer + skip weights; stacked so the
    # output matmul is ONE (TB, O+H) @ (O+H, NB1*K) call.
    emb_EK = params['emb_KE'].T                                           # (E, K)
    w2e = jnp.einsum('oje,ek->ojk', params['w2'].reshape(O, NB1, E), emb_EK).reshape(O, NBK)
    wse = jnp.einsum('hje,ek->hjk', params['ws'].reshape(H, NB1, E), emb_EK).reshape(H, NBK)
    be = jnp.einsum('je,ek->jk', (params['b2'] + params['bs']).reshape(NB1, E),
                    emb_EK).reshape(1, NBK)
    wcat = jnp.concatenate([w2e, wse], axis=0)                            # (O+H, NB1*K)

    const_args = (jnp.asarray(_INV_ROW), jnp.asarray(_LOCINV_ROW),
                  jnp.asarray(_LOGC_ROW), jnp.asarray(_SEL))

    kernel = partial(_erpp_kernel, batch=Bn, hidden=H, n_types=K)

    # Single invocation (no grid): all operands resident in VMEM once,
    # one lane-dense (TB, 128) output slab.
    out = pl.pallas_call(
        kernel,
        out_shape=jax.ShapeDtypeStruct((TB, OUT_PAD), jnp.float32),
        scratch_shapes=[pltpu.VMEM((TB, H), jnp.float32)],                # GRU history
    )(feat_tm, dt1_tm, wih_all, bih_fold, whh_all, bhh_n,
      w1a, b1a, wcat, be, *const_args)

    out_bt = out.reshape(Tn, Bn, OUT_PAD).swapaxes(0, 1)                  # (B, T, 128)
    lbw = out_bt[..., :NBK].reshape(Bn, Tn, NB1, K).swapaxes(-1, -2)      # (B, T, K, NB1)
    li = out_bt[..., NBK:NBK + K]                                         # (B, T, K)
    return li, lbw


# --------------------------- pure-JAX reference -------------------------------
def erpp_reference(event_seqs, params):
    feat, dt1 = build_feat(event_seqs, params['emb_KE'])
    Bn, Tn, _ = feat.shape
    h = jnp.zeros((Bn, H), jnp.float32)
    hs = []
    for t in range(Tn):
        x = feat[:, t]
        gir = x @ params['wih'][0] + params['bih'][0]
        giz = x @ params['wih'][1] + params['bih'][1]
        gin = x @ params['wih'][2] + params['bih'][2]
        ghr = h @ params['whh'][0] + params['bhh'][0]
        ghz = h @ params['whh'][1] + params['bhh'][1]
        ghn = h @ params['whh'][2] + params['bhh'][2]
        r = jax.nn.sigmoid(gir + ghr)
        z = jax.nn.sigmoid(giz + ghz)
        n = jnp.tanh(gin + r * ghn)
        h = (1.0 - z) * n + z * h
        hs.append(h)
    hist = jnp.stack(hs, axis=1)                                   # (B, T, H)
    X = hist.reshape(Bn * Tn, H)
    h1 = jnp.maximum(X @ params['w1'] + params['b1'], 0.0)
    y = h1 @ params['w2'] + params['b2'] + X @ params['ws'] + params['bs']
    lbf = y.reshape(Bn, Tn, NB1, E)
    lbw = jnp.einsum('btje,ek->btkj', lbf, params['emb_KE'].T)     # (B, T, K, NB1)
    loc = jnp.asarray(LOC, jnp.float32)
    scale = jnp.asarray(SCALE, jnp.float32)
    logp = (-0.5 * ((dt1[..., None] - loc) / scale) ** 2
            - jnp.log(scale) - 0.5 * math.log(2.0 * math.pi))      # (B, T, NB)
    bv = jnp.concatenate([jnp.zeros((Bn, Tn, 1)), logp], axis=-1)  # (B, T, NB1)
    li = jax.nn.logsumexp(lbw + bv[:, :, None, :], axis=-1)        # (B, T, K)
    return li, lbw


# --------------------------------- main ---------------------------------------
def init_params(key):
    ks = jax.random.split(key, 12)
    s = 0.1
    emb_KE = s * jax.random.normal(ks[0], (K, E), jnp.float32)      # type embeddings
    params = dict(
        emb_KE=emb_KE,
        wih=s * jax.random.normal(ks[1], (3, 1 + E, H), jnp.float32),
        whh=s * jax.random.normal(ks[2], (3, H, H), jnp.float32),
        bih=s * jax.random.normal(ks[3], (3, 1, H), jnp.float32),
        bhh=s * jax.random.normal(ks[4], (3, 1, H), jnp.float32),
        w1=s * jax.random.normal(ks[5], (H, O), jnp.float32),
        b1=s * jax.random.normal(ks[6], (1, O), jnp.float32),
        w2=s * jax.random.normal(ks[7], (O, O), jnp.float32),
        b2=s * jax.random.normal(ks[8], (1, O), jnp.float32),
        ws=s * jax.random.normal(ks[9], (H, O), jnp.float32),
        bs=s * jax.random.normal(ks[10], (1, O), jnp.float32),
    )
    return params, ks[11]


if __name__ == "__main__":
    key = jax.random.PRNGKey(0)
    params, key = init_params(key)

    k1, k2 = jax.random.split(key)
    dts = jax.random.uniform(k1, (B, T), jnp.float32, 0.1, 1.0)
    timestamps = jnp.cumsum(dts, axis=1)
    types = jax.random.randint(k2, (B, T), 0, K).astype(jnp.float32)
    event_seqs = jnp.stack([timestamps, types], axis=-1)            # (B, T, 2)

    li, lbw = erpp_forward(event_seqs, params)
    jax.block_until_ready((li, lbw))

    li_ref, lbw_ref = erpp_reference(event_seqs, params)
    assert li.shape == (B, T, K) and lbw.shape == (B, T, K, NB1)
    err_li = float(jnp.max(jnp.abs(li - li_ref)))
    err_lbw = float(jnp.max(jnp.abs(lbw - lbw_ref)))
    assert err_li < 2e-4, f"log_intensities mismatch: {err_li}"
    assert err_lbw < 2e-4, f"log_basis_weights mismatch: {err_lbw}"

    print("KERNEL_OK")
</pallas_src>

<mosaic_0001>
module attributes {stable_mosaic.version = 11 : i64} {
  func.func @_erpp_kernel(%arg0: memref<16x33xf32, #tpu.memory_space<vmem>>, %arg1: memref<16x1xf32, #tpu.memory_space<vmem>>, %arg2: memref<33x96xf32, #tpu.memory_space<vmem>>, %arg3: memref<1x96xf32, #tpu.memory_space<vmem>>, %arg4: memref<32x96xf32, #tpu.memory_space<vmem>>, %arg5: memref<1x32xf32, #tpu.memory_space<vmem>>, %arg6: memref<32x192xf32, #tpu.memory_space<vmem>>, %arg7: memref<1x192xf32, #tpu.memory_space<vmem>>, %arg8: memref<192x20xf32, #tpu.memory_space<vmem>>, %arg9: memref<1x20xf32, #tpu.memory_space<vmem>>, %arg10: memref<1x20xf32, #tpu.memory_space<vmem>>, %arg11: memref<1x20xf32, #tpu.memory_space<vmem>>, %arg12: memref<1x20xf32, #tpu.memory_space<vmem>>, %arg13: memref<20x4xf32, #tpu.memory_space<vmem>>, %arg14: memref<16x128xf32, #tpu.memory_space<vmem>>, %arg15: memref<16x32xf32, #tpu.memory_space<vmem>>) attributes {dimension_semantics = [], scalar_prefetch = 0 : i64, scratch_operands = 1 : i64, tpu.core_type = #tpu.core_type<tc>} {
    %c0 = arith.constant 0 : index
    %c0_0 = arith.constant 0 : index
    %0 = vector.load %arg0[%c0, %c0_0] : memref<16x33xf32, #tpu.memory_space<vmem>>, vector<16x33xf32>
    %c0_1 = arith.constant 0 : index
    %c0_2 = arith.constant 0 : index
    %1 = vector.load %arg2[%c0_1, %c0_2] : memref<33x96xf32, #tpu.memory_space<vmem>>, vector<33x96xf32>
    %cst = arith.constant dense<0.000000e+00> : vector<16x96xf32>
    %2 = tpu.matmul %0, %1, %cst {dimension_numbers = #tpu.dot_dimension_numbers<[1], [0], [0], [1], [0, 0, 1, 1], [], []>} : vector<16x33xf32>, vector<33x96xf32>, vector<16x96xf32> -> vector<16x96xf32>
    %c0_3 = arith.constant 0 : index
    %c0_4 = arith.constant 0 : index
    %3 = vector.load %arg3[%c0_3, %c0_4] : memref<1x96xf32, #tpu.memory_space<vmem>>, vector<1x96xf32>
    %4 = vector.broadcast %3 : vector<1x96xf32> to vector<16x96xf32>
    %5 = arith.addf %2, %4 : vector<16x96xf32>
    %c0_5 = arith.constant 0 : index
    %c0_6 = arith.constant 0 : index
    %6 = vector.load %arg4[%c0_5, %c0_6] : memref<32x96xf32, #tpu.memory_space<vmem>>, vector<32x96xf32>
    %c0_7 = arith.constant 0 : index
    %c0_8 = arith.constant 0 : index
    %7 = vector.load %arg5[%c0_7, %c0_8] : memref<1x32xf32, #tpu.memory_space<vmem>>, vector<1x32xf32>
    %cst_9 = arith.constant 0.000000e+00 : f32
    %8 = vector.broadcast %cst_9 : f32 to vector<2x32xf32>
    %cst_10 = arith.constant dense<0.000000e+00> : vector<2x96xf32>
    %9 = tpu.matmul %8, %6, %cst_10 {dimension_numbers = #tpu.dot_dimension_numbers<[1], [0], [0], [1], [0, 0, 1, 1], [], []>} : vector<2x32xf32>, vector<32x96xf32>, vector<2x96xf32> -> vector<2x96xf32>
    %10 = vector.extract_strided_slice %5 {offsets = [0, 0], sizes = [2, 96], strides = [1, 1]} : vector<16x96xf32> to vector<2x96xf32>
    %11 = vector.extract_strided_slice %10 {offsets = [0, 0], sizes = [2, 32], strides = [1, 1]} : vector<2x96xf32> to vector<2x32xf32>
    %12 = vector.extract_strided_slice %9 {offsets = [0, 0], sizes = [2, 32], strides = [1, 1]} : vector<2x96xf32> to vector<2x32xf32>
    %13 = arith.addf %11, %12 : vector<2x32xf32>
    %14 = arith.negf %13 : vector<2x32xf32>
    %15 = math.exp %14 : vector<2x32xf32>
    %cst_11 = arith.constant 1.000000e+00 : f32
    %16 = vector.broadcast %cst_11 : f32 to vector<2x32xf32>
    %17 = arith.addf %16, %15 : vector<2x32xf32>
    %18 = arith.divf %16, %17 : vector<2x32xf32>
    %19 = vector.extract_strided_slice %10 {offsets = [0, 32], sizes = [2, 32], strides = [1, 1]} : vector<2x96xf32> to vector<2x32xf32>
    %20 = vector.extract_strided_slice %9 {offsets = [0, 32], sizes = [2, 32], strides = [1, 1]} : vector<2x96xf32> to vector<2x32xf32>
    %21 = arith.addf %19, %20 : vector<2x32xf32>
    %22 = arith.negf %21 : vector<2x32xf32>
    %23 = math.exp %22 : vector<2x32xf32>
    %cst_12 = arith.constant 1.000000e+00 : f32
    %24 = vector.broadcast %cst_12 : f32 to vector<2x32xf32>
    %25 = arith.addf %24, %23 : vector<2x32xf32>
    %26 = arith.divf %24, %25 : vector<2x32xf32>
    %27 = vector.extract_strided_slice %10 {offsets = [0, 64], sizes = [2, 32], strides = [1, 1]} : vector<2x96xf32> to vector<2x32xf32>
    %28 = vector.extract_strided_slice %9 {offsets = [0, 64], sizes = [2, 32], strides = [1, 1]} : vector<2x96xf32> to vector<2x32xf32>
    %29 = vector.broadcast %7 : vector<1x32xf32> to vector<2x32xf32>
    %30 = arith.addf %28, %29 : vector<2x32xf32>
    %31 = arith.mulf %18, %30 : vector<2x32xf32>
    %32 = arith.addf %27, %31 : vector<2x32xf32>
    %33 = math.tanh %32 : vector<2x32xf32>
    %cst_13 = arith.constant 1.000000e+00 : f32
    %34 = vector.broadcast %cst_13 : f32 to vector<2x32xf32>
    %35 = arith.subf %34, %26 : vector<2x32xf32>
    %36 = arith.mulf %35, %33 : vector<2x32xf32>
    %37 = arith.mulf %26, %8 : vector<2x32xf32>
    %38 = arith.addf %36, %37 : vector<2x32xf32>
    %c0_14 = arith.constant 0 : index
    %c0_15 = arith.constant 0 : index
    %39 = vector.load %arg15[%c0_14, %c0_15] : memref<16x32xf32, #tpu.memory_space<vmem>>, vector<2x32xf32>
    tpu.vector_store %arg15[%c0_14, %c0_15], %38 {strides = array<i32>} : memref<16x32xf32, #tpu.memory_space<vmem>>, vector<2x32xf32>,
    %cst_16 = arith.constant dense<0.000000e+00> : vector<2x96xf32>
    %40 = tpu.matmul %38, %6, %cst_16 {dimension_numbers = #tpu.dot_dimension_numbers<[1], [0], [0], [1], [0, 0, 1, 1], [], []>} : vector<2x32xf32>, vector<32x96xf32>, vector<2x96xf32> -> vector<2x96xf32>
    %41 = vector.extract_strided_slice %5 {offsets = [2, 0], sizes = [2, 96], strides = [1, 1]} : vector<16x96xf32> to vector<2x96xf32>
    %42 = vector.extract_strided_slice %41 {offsets = [0, 0], sizes = [2, 32], strides = [1, 1]} : vector<2x96xf32> to vector<2x32xf32>
    %43 = vector.extract_strided_slice %40 {offsets = [0, 0], sizes = [2, 32], strides = [1, 1]} : vector<2x96xf32> to vector<2x32xf32>
    %44 = arith.addf %42, %43 : vector<2x32xf32>
    %45 = arith.negf %44 : vector<2x32xf32>
    %46 = math.exp %45 : vector<2x32xf32>
    %cst_17 = arith.constant 1.000000e+00 : f32
    %47 = vector.broadcast %cst_17 : f32 to vector<2x32xf32>
    %48 = arith.addf %47, %46 : vector<2x32xf32>
    %49 = arith.divf %47, %48 : vector<2x32xf32>
    %50 = vector.extract_strided_slice %41 {offsets = [0, 32], sizes = [2, 32], strides = [1, 1]} : vector<2x96xf32> to vector<2x32xf32>
    %51 = vector.extract_strided_slice %40 {offsets = [0, 32], sizes = [2, 32], strides = [1, 1]} : vector<2x96xf32> to vector<2x32xf32>
    %52 = arith.addf %50, %51 : vector<2x32xf32>
    %53 = arith.negf %52 : vector<2x32xf32>
    %54 = math.exp %53 : vector<2x32xf32>
    %cst_18 = arith.constant 1.000000e+00 : f32
    %55 = vector.broadcast %cst_18 : f32 to vector<2x32xf32>
    %56 = arith.addf %55, %54 : vector<2x32xf32>
    %57 = arith.divf %55, %56 : vector<2x32xf32>
    %58 = vector.extract_strided_slice %41 {offsets = [0, 64], sizes = [2, 32], strides = [1, 1]} : vector<2x96xf32> to vector<2x32xf32>
    %59 = vector.extract_strided_slice %40 {offsets = [0, 64], sizes = [2, 32], strides = [1, 1]} : vector<2x96xf32> to vector<2x32xf32>
    %60 = vector.broadcast %7 : vector<1x32xf32> to vector<2x32xf32>
    %61 = arith.addf %59, %60 : vector<2x32xf32>
    %62 = arith.mulf %49, %61 : vector<2x32xf32>
    %63 = arith.addf %58, %62 : vector<2x32xf32>
    %64 = math.tanh %63 : vector<2x32xf32>
    %cst_19 = arith.constant 1.000000e+00 : f32
    %65 = vector.broadcast %cst_19 : f32 to vector<2x32xf32>
    %66 = arith.subf %65, %57 : vector<2x32xf32>
    %67 = arith.mulf %66, %64 : vector<2x32xf32>
    %68 = arith.mulf %57, %38 : vector<2x32xf32>
    %69 = arith.addf %67, %68 : vector<2x32xf32>
    %c2 = arith.constant 2 : index
    %c0_20 = arith.constant 0 : index
    %70 = vector.load %arg15[%c2, %c0_20] : memref<16x32xf32, #tpu.memory_space<vmem>>, vector<2x32xf32>
    tpu.vector_store %arg15[%c2, %c0_20], %69 {strides = array<i32>} : memref<16x32xf32, #tpu.memory_space<vmem>>, vector<2x32xf32>,
    %cst_21 = arith.constant dense<0.000000e+00> : vector<2x96xf32>
    %71 = tpu.matmul %69, %6, %cst_21 {dimension_numbers = #tpu.dot_dimension_numbers<[1], [0], [0], [1], [0, 0, 1, 1], [], []>} : vector<2x32xf32>, vector<32x96xf32>, vector<2x96xf32> -> vector<2x96xf32>
    %72 = vector.extract_strided_slice %5 {offsets = [4, 0], sizes = [2, 96], strides = [1, 1]} : vector<16x96xf32> to vector<2x96xf32>
    %73 = vector.extract_strided_slice %72 {offsets = [0, 0], sizes = [2, 32], strides = [1, 1]} : vector<2x96xf32> to vector<2x32xf32>
    %74 = vector.extract_strided_slice %71 {offsets = [0, 0], sizes = [2, 32], strides = [1, 1]} : vector<2x96xf32> to vector<2x32xf32>
    %75 = arith.addf %73, %74 : vector<2x32xf32>
    %76 = arith.negf %75 : vector<2x32xf32>
    %77 = math.exp %76 : vector<2x32xf32>
    %cst_22 = arith.constant 1.000000e+00 : f32
    %78 = vector.broadcast %cst_22 : f32 to vector<2x32xf32>
    %79 = arith.addf %78, %77 : vector<2x32xf32>
    %80 = arith.divf %78, %79 : vector<2x32xf32>
    %81 = vector.extract_strided_slice %72 {offsets = [0, 32], sizes = [2, 32], strides = [1, 1]} : vector<2x96xf32> to vector<2x32xf32>
    %82 = vector.extract_strided_slice %71 {offsets = [0, 32], sizes = [2, 32], strides = [1, 1]} : vector<2x96xf32> to vector<2x32xf32>
    %83 = arith.addf %81, %82 : vector<2x32xf32>
    %84 = arith.negf %83 : vector<2x32xf32>
    %85 = math.exp %84 : vector<2x32xf32>
    %cst_23 = arith.constant 1.000000e+00 : f32
    %86 = vector.broadcast %cst_23 : f32 to vector<2x32xf32>
    %87 = arith.addf %86, %85 : vector<2x32xf32>
    %88 = arith.divf %86, %87 : vector<2x32xf32>
    %89 = vector.extract_strided_slice %72 {offsets = [0, 64], sizes = [2, 32], strides = [1, 1]} : vector<2x96xf32> to vector<2x32xf32>
    %90 = vector.extract_strided_slice %71 {offsets = [0, 64], sizes = [2, 32], strides = [1, 1]} : vector<2x96xf32> to vector<2x32xf32>
    %91 = vector.broadcast %7 : vector<1x32xf32> to vector<2x32xf32>
    %92 = arith.addf %90, %91 : vector<2x32xf32>
    %93 = arith.mulf %80, %92 : vector<2x32xf32>
    %94 = arith.addf %89, %93 : vector<2x32xf32>
    %95 = math.tanh %94 : vector<2x32xf32>
    %cst_24 = arith.constant 1.000000e+00 : f32
    %96 = vector.broadcast %cst_24 : f32 to vector<2x32xf32>
    %97 = arith.subf %96, %88 : vector<2x32xf32>
    %98 = arith.mulf %97, %95 : vector<2x32xf32>
    %99 = arith.mulf %88, %69 : vector<2x32xf32>
    %100 = arith.addf %98, %99 : vector<2x32xf32>
    %c4 = arith.constant 4 : index
    %c0_25 = arith.constant 0 : index
    %101 = vector.load %arg15[%c4, %c0_25] : memref<16x32xf32, #tpu.memory_space<vmem>>, vector<2x32xf32>
    tpu.vector_store %arg15[%c4, %c0_25], %100 {strides = array<i32>} : memref<16x32xf32, #tpu.memory_space<vmem>>, vector<2x32xf32>,
    %cst_26 = arith.constant dense<0.000000e+00> : vector<2x96xf32>
    %102 = tpu.matmul %100, %6, %cst_26 {dimension_numbers = #tpu.dot_dimension_numbers<[1], [0], [0], [1], [0, 0, 1, 1], [], []>} : vector<2x32xf32>, vector<32x96xf32>, vector<2x96xf32> -> vector<2x96xf32>
    %103 = vector.extract_strided_slice %5 {offsets = [6, 0], sizes = [2, 96], strides = [1, 1]} : vector<16x96xf32> to vector<2x96xf32>
    %104 = vector.extract_strided_slice %103 {offsets = [0, 0], sizes = [2, 32], strides = [1, 1]} : vector<2x96xf32> to vector<2x32xf32>
    %105 = vector.extract_strided_slice %102 {offsets = [0, 0], sizes = [2, 32], strides = [1, 1]} : vector<2x96xf32> to vector<2x32xf32>
    %106 = arith.addf %104, %105 : vector<2x32xf32>
    %107 = arith.negf %106 : vector<2x32xf32>
    %108 = math.exp %107 : vector<2x32xf32>
    %cst_27 = arith.constant 1.000000e+00 : f32
    %109 = vector.broadcast %cst_27 : f32 to vector<2x32xf32>
    %110 = arith.addf %109, %108 : vector<2x32xf32>
    %111 = arith.divf %109, %110 : vector<2x32xf32>
    %112 = vector.extract_strided_slice %103 {offsets = [0, 32], sizes = [2, 32], strides = [1, 1]} : vector<2x96xf32> to vector<2x32xf32>
    %113 = vector.extract_strided_slice %102 {offsets = [0, 32], sizes = [2, 32], strides = [1, 1]} : vector<2x96xf32> to vector<2x32xf32>
    %114 = arith.addf %112, %113 : vector<2x32xf32>
    %115 = arith.negf %114 : vector<2x32xf32>
    %116 = math.exp %115 : vector<2x32xf32>
    %cst_28 = arith.constant 1.000000e+00 : f32
    %117 = vector.broadcast %cst_28 : f32 to vector<2x32xf32>
    %118 = arith.addf %117, %116 : vector<2x32xf32>
    %119 = arith.divf %117, %118 : vector<2x32xf32>
    %120 = vector.extract_strided_slice %103 {offsets = [0, 64], sizes = [2, 32], strides = [1, 1]} : vector<2x96xf32> to vector<2x32xf32>
    %121 = vector.extract_strided_slice %102 {offsets = [0, 64], sizes = [2, 32], strides = [1, 1]} : vector<2x96xf32> to vector<2x32xf32>
    %122 = vector.broadcast %7 : vector<1x32xf32> to vector<2x32xf32>
    %123 = arith.addf %121, %122 : vector<2x32xf32>
    %124 = arith.mulf %111, %123 : vector<2x32xf32>
    %125 = arith.addf %120, %124 : vector<2x32xf32>
    %126 = math.tanh %125 : vector<2x32xf32>
    %cst_29 = arith.constant 1.000000e+00 : f32
    %127 = vector.broadcast %cst_29 : f32 to vector<2x32xf32>
    %128 = arith.subf %127, %119 : vector<2x32xf32>
    %129 = arith.mulf %128, %126 : vector<2x32xf32>
    %130 = arith.mulf %119, %100 : vector<2x32xf32>
    %131 = arith.addf %129, %130 : vector<2x32xf32>
    %c6 = arith.constant 6 : index
    %c0_30 = arith.constant 0 : index
    %132 = vector.load %arg15[%c6, %c0_30] : memref<16x32xf32, #tpu.memory_space<vmem>>, vector<2x32xf32>
    tpu.vector_store %arg15[%c6, %c0_30], %131 {strides = array<i32>} : memref<16x32xf32, #tpu.memory_space<vmem>>, vector<2x32xf32>,
    %cst_31 = arith.constant dense<0.000000e+00> : vector<2x96xf32>
    %133 = tpu.matmul %131, %6, %cst_31 {dimension_numbers = #tpu.dot_dimension_numbers<[1], [0], [0], [1], [0, 0, 1, 1], [], []>} : vector<2x32xf32>, vector<32x96xf32>, vector<2x96xf32> -> vector<2x96xf32>
    %134 = vector.extract_strided_slice %5 {offsets = [8, 0], sizes = [2, 96], strides = [1, 1]} : vector<16x96xf32> to vector<2x96xf32>
    %135 = vector.extract_strided_slice %134 {offsets = [0, 0], sizes = [2, 32], strides = [1, 1]} : vector<2x96xf32> to vector<2x32xf32>
    %136 = vector.extract_strided_slice %133 {offsets = [0, 0], sizes = [2, 32], strides = [1, 1]} : vector<2x96xf32> to vector<2x32xf32>
    %137 = arith.addf %135, %136 : vector<2x32xf32>
    %138 = arith.negf %137 : vector<2x32xf32>
    %139 = math.exp %138 : vector<2x32xf32>
    %cst_32 = arith.constant 1.000000e+00 : f32
    %140 = vector.broadcast %cst_32 : f32 to vector<2x32xf32>
    %141 = arith.addf %140, %139 : vector<2x32xf32>
    %142 = arith.divf %140, %141 : vector<2x32xf32>
    %143 = vector.extract_strided_slice %134 {offsets = [0, 32], sizes = [2, 32], strides = [1, 1]} : vector<2x96xf32> to vector<2x32xf32>
    %144 = vector.extract_strided_slice %133 {offsets = [0, 32], sizes = [2, 32], strides = [1, 1]} : vector<2x96xf32> to vector<2x32xf32>
    %145 = arith.addf %143, %144 : vector<2x32xf32>
    %146 = arith.negf %145 : vector<2x32xf32>
    %147 = math.exp %146 : vector<2x32xf32>
    %cst_33 = arith.constant 1.000000e+00 : f32
    %148 = vector.broadcast %cst_33 : f32 to vector<2x32xf32>
    %149 = arith.addf %148, %147 : vector<2x32xf32>
    %150 = arith.divf %148, %149 : vector<2x32xf32>
    %151 = vector.extract_strided_slice %134 {offsets = [0, 64], sizes = [2, 32], strides = [1, 1]} : vector<2x96xf32> to vector<2x32xf32>
    %152 = vector.extract_strided_slice %133 {offsets = [0, 64], sizes = [2, 32], strides = [1, 1]} : vector<2x96xf32> to vector<2x32xf32>
    %153 = vector.broadcast %7 : vector<1x32xf32> to vector<2x32xf32>
    %154 = arith.addf %152, %153 : vector<2x32xf32>
    %155 = arith.mulf %142, %154 : vector<2x32xf32>
    %156 = arith.addf %151, %155 : vector<2x32xf32>
    %157 = math.tanh %156 : vector<2x32xf32>
    %cst_34 = arith.constant 1.000000e+00 : f32
    %158 = vector.broadcast %cst_34 : f32 to vector<2x32xf32>
    %159 = arith.subf %158, %150 : vector<2x32xf32>
    %160 = arith.mulf %159, %157 : vector<2x32xf32>
    %161 = arith.mulf %150, %131 : vector<2x32xf32>
    %162 = arith.addf %160, %161 : vector<2x32xf32>
    %c8 = arith.constant 8 : index
    %c0_35 = arith.constant 0 : index
    %163 = vector.load %arg15[%c8, %c0_35] : memref<16x32xf32, #tpu.memory_space<vmem>>, vector<2x32xf32>
    tpu.vector_store %arg15[%c8, %c0_35], %162 {strides = array<i32>} : memref<16x32xf32, #tpu.memory_space<vmem>>, vector<2x32xf32>,
    %cst_36 = arith.constant dense<0.000000e+00> : vector<2x96xf32>
    %164 = tpu.matmul %162, %6, %cst_36 {dimension_numbers = #tpu.dot_dimension_numbers<[1], [0], [0], [1], [0, 0, 1, 1], [], []>} : vector<2x32xf32>, vector<32x96xf32>, vector<2x96xf32> -> vector<2x96xf32>
    %165 = vector.extract_strided_slice %5 {offsets = [10, 0], sizes = [2, 96], strides = [1, 1]} : vector<16x96xf32> to vector<2x96xf32>
    %166 = vector.extract_strided_slice %165 {offsets = [0, 0], sizes = [2, 32], strides = [1, 1]} : vector<2x96xf32> to vector<2x32xf32>
    %167 = vector.extract_strided_slice %164 {offsets = [0, 0], sizes = [2, 32], strides = [1, 1]} : vector<2x96xf32> to vector<2x32xf32>
    %168 = arith.addf %166, %167 : vector<2x32xf32>
    %169 = arith.negf %168 : vector<2x32xf32>
    %170 = math.exp %169 : vector<2x32xf32>
    %cst_37 = arith.constant 1.000000e+00 : f32
    %171 = vector.broadcast %cst_37 : f32 to vector<2x32xf32>
    %172 = arith.addf %171, %170 : vector<2x32xf32>
    %173 = arith.divf %171, %172 : vector<2x32xf32>
    %174 = vector.extract_strided_slice %165 {offsets = [0, 32], sizes = [2, 32], strides = [1, 1]} : vector<2x96xf32> to vector<2x32xf32>
    %175 = vector.extract_strided_slice %164 {offsets = [0, 32], sizes = [2, 32], strides = [1, 1]} : vector<2x96xf32> to vector<2x32xf32>
    %176 = arith.addf %174, %175 : vector<2x32xf32>
    %177 = arith.negf %176 : vector<2x32xf32>
    %178 = math.exp %177 : vector<2x32xf32>
    %cst_38 = arith.constant 1.000000e+00 : f32
    %179 = vector.broadcast %cst_38 : f32 to vector<2x32xf32>
    %180 = arith.addf %179, %178 : vector<2x32xf32>
    %181 = arith.divf %179, %180 : vector<2x32xf32>
    %182 = vector.extract_strided_slice %165 {offsets = [0, 64], sizes = [2, 32], strides = [1, 1]} : vector<2x96xf32> to vector<2x32xf32>
    %183 = vector.extract_strided_slice %164 {offsets = [0, 64], sizes = [2, 32], strides = [1, 1]} : vector<2x96xf32> to vector<2x32xf32>
    %184 = vector.broadcast %7 : vector<1x32xf32> to vector<2x32xf32>
    %185 = arith.addf %183, %184 : vector<2x32xf32>
    %186 = arith.mulf %173, %185 : vector<2x32xf32>
    %187 = arith.addf %182, %186 : vector<2x32xf32>
    %188 = math.tanh %187 : vector<2x32xf32>
    %cst_39 = arith.constant 1.000000e+00 : f32
    %189 = vector.broadcast %cst_39 : f32 to vector<2x32xf32>
    %190 = arith.subf %189, %181 : vector<2x32xf32>
    %191 = arith.mulf %190, %188 : vector<2x32xf32>
    %192 = arith.mulf %181, %162 : vector<2x32xf32>
    %193 = arith.addf %191, %192 : vector<2x32xf32>
    %c10 = arith.constant 10 : index
    %c0_40 = arith.constant 0 : index
    %194 = vector.load %arg15[%c10, %c0_40] : memref<16x32xf32, #tpu.memory_space<vmem>>, vector<2x32xf32>
    tpu.vector_store %arg15[%c10, %c0_40], %193 {strides = array<i32>} : memref<16x32xf32, #tpu.memory_space<vmem>>, vector<2x32xf32>,
    %cst_41 = arith.constant dense<0.000000e+00> : vector<2x96xf32>
    %195 = tpu.matmul %193, %6, %cst_41 {dimension_numbers = #tpu.dot_dimension_numbers<[1], [0], [0], [1], [0, 0, 1, 1], [], []>} : vector<2x32xf32>, vector<32x96xf32>, vector<2x96xf32> -> vector<2x96xf32>
    %196 = vector.extract_strided_slice %5 {offsets = [12, 0], sizes = [2, 96], strides = [1, 1]} : vector<16x96xf32> to vector<2x96xf32>
    %197 = vector.extract_strided_slice %196 {offsets = [0, 0], sizes = [2, 32], strides = [1, 1]} : vector<2x96xf32> to vector<2x32xf32>
    %198 = vector.extract_strided_slice %195 {offsets = [0, 0], sizes = [2, 32], strides = [1, 1]} : vector<2x96xf32> to vector<2x32xf32>
    %199 = arith.addf %197, %198 : vector<2x32xf32>
    %200 = arith.negf %199 : vector<2x32xf32>
    %201 = math.exp %200 : vector<2x32xf32>
    %cst_42 = arith.constant 1.000000e+00 : f32
    %202 = vector.broadcast %cst_42 : f32 to vector<2x32xf32>
    %203 = arith.addf %202, %201 : vector<2x32xf32>
    %204 = arith.divf %202, %203 : vector<2x32xf32>
    %205 = vector.extract_strided_slice %196 {offsets = [0, 32], sizes = [2, 32], strides = [1, 1]} : vector<2x96xf32> to vector<2x32xf32>
    %206 = vector.extract_strided_slice %195 {offsets = [0, 32], sizes = [2, 32], strides = [1, 1]} : vector<2x96xf32> to vector<2x32xf32>
    %207 = arith.addf %205, %206 : vector<2x32xf32>
    %208 = arith.negf %207 : vector<2x32xf32>
    %209 = math.exp %208 : vector<2x32xf32>
    %cst_43 = arith.constant 1.000000e+00 : f32
    %210 = vector.broadcast %cst_43 : f32 to vector<2x32xf32>
    %211 = arith.addf %210, %209 : vector<2x32xf32>
    %212 = arith.divf %210, %211 : vector<2x32xf32>
    %213 = vector.extract_strided_slice %196 {offsets = [0, 64], sizes = [2, 32], strides = [1, 1]} : vector<2x96xf32> to vector<2x32xf32>
    %214 = vector.extract_strided_slice %195 {offsets = [0, 64], sizes = [2, 32], strides = [1, 1]} : vector<2x96xf32> to vector<2x32xf32>
    %215 = vector.broadcast %7 : vector<1x32xf32> to vector<2x32xf32>
    %216 = arith.addf %214, %215 : vector<2x32xf32>
    %217 = arith.mulf %204, %216 : vector<2x32xf32>
    %218 = arith.addf %213, %217 : vector<2x32xf32>
    %219 = math.tanh %218 : vector<2x32xf32>
    %cst_44 = arith.constant 1.000000e+00 : f32
    %220 = vector.broadcast %cst_44 : f32 to vector<2x32xf32>
    %221 = arith.subf %220, %212 : vector<2x32xf32>
    %222 = arith.mulf %221, %219 : vector<2x32xf32>
    %223 = arith.mulf %212, %193 : vector<2x32xf32>
    %224 = arith.addf %222, %223 : vector<2x32xf32>
    %c12 = arith.constant 12 : index
    %c0_45 = arith.constant 0 : index
    %225 = vector.load %arg15[%c12, %c0_45] : memref<16x32xf32, #tpu.memory_space<vmem>>, vector<2x32xf32>
    tpu.vector_store %arg15[%c12, %c0_45], %224 {strides = array<i32>} : memref<16x32xf32, #tpu.memory_space<vmem>>, vector<2x32xf32>,
    %cst_46 = arith.constant dense<0.000000e+00> : vector<2x96xf32>
    %226 = tpu.matmul %224, %6, %cst_46 {dimension_numbers = #tpu.dot_dimension_numbers<[1], [0], [0], [1], [0, 0, 1, 1], [], []>} : vector<2x32xf32>, vector<32x96xf32>, vector<2x96xf32> -> vector<2x96xf32>
    %227 = vector.extract_strided_slice %5 {offsets = [14, 0], sizes = [2, 96], strides = [1, 1]} : vector<16x96xf32> to vector<2x96xf32>
    %228 = vector.extract_strided_slice %227 {offsets = [0, 0], sizes = [2, 32], strides = [1, 1]} : vector<2x96xf32> to vector<2x32xf32>
    %229 = vector.extract_strided_slice %226 {offsets = [0, 0], sizes = [2, 32], strides = [1, 1]} : vector<2x96xf32> to vector<2x32xf32>
    %230 = arith.addf %228, %229 : vector<2x32xf32>
    %231 = arith.negf %230 : vector<2x32xf32>
    %232 = math.exp %231 : vector<2x32xf32>
    %cst_47 = arith.constant 1.000000e+00 : f32
    %233 = vector.broadcast %cst_47 : f32 to vector<2x32xf32>
    %234 = arith.addf %233, %232 : vector<2x32xf32>
    %235 = arith.divf %233, %234 : vector<2x32xf32>
    %236 = vector.extract_strided_slice %227 {offsets = [0, 32], sizes = [2, 32], strides = [1, 1]} : vector<2x96xf32> to vector<2x32xf32>
    %237 = vector.extract_strided_slice %226 {offsets = [0, 32], sizes = [2, 32], strides = [1, 1]} : vector<2x96xf32> to vector<2x32xf32>
    %238 = arith.addf %236, %237 : vector<2x32xf32>
    %239 = arith.negf %238 : vector<2x32xf32>
    %240 = math.exp %239 : vector<2x32xf32>
    %cst_48 = arith.constant 1.000000e+00 : f32
    %241 = vector.broadcast %cst_48 : f32 to vector<2x32xf32>
    %242 = arith.addf %241, %240 : vector<2x32xf32>
    %243 = arith.divf %241, %242 : vector<2x32xf32>
    %244 = vector.extract_strided_slice %227 {offsets = [0, 64], sizes = [2, 32], strides = [1, 1]} : vector<2x96xf32> to vector<2x32xf32>
    %245 = vector.extract_strided_slice %226 {offsets = [0, 64], sizes = [2, 32], strides = [1, 1]} : vector<2x96xf32> to vector<2x32xf32>
    %246 = vector.broadcast %7 : vector<1x32xf32> to vector<2x32xf32>
    %247 = arith.addf %245, %246 : vector<2x32xf32>
    %248 = arith.mulf %235, %247 : vector<2x32xf32>
    %249 = arith.addf %244, %248 : vector<2x32xf32>
    %250 = math.tanh %249 : vector<2x32xf32>
    %cst_49 = arith.constant 1.000000e+00 : f32
    %251 = vector.broadcast %cst_49 : f32 to vector<2x32xf32>
    %252 = arith.subf %251, %243 : vector<2x32xf32>
    %253 = arith.mulf %252, %250 : vector<2x32xf32>
    %254 = arith.mulf %243, %224 : vector<2x32xf32>
    %255 = arith.addf %253, %254 : vector<2x32xf32>
    %c14 = arith.constant 14 : index
    %c0_50 = arith.constant 0 : index
    %256 = vector.load %arg15[%c14, %c0_50] : memref<16x32xf32, #tpu.memory_space<vmem>>, vector<2x32xf32>
    tpu.vector_store %arg15[%c14, %c0_50], %255 {strides = array<i32>} : memref<16x32xf32, #tpu.memory_space<vmem>>, vector<2x32xf32>,
    %c0_51 = arith.constant 0 : index
    %c0_52 = arith.constant 0 : index
    %257 = vector.load %arg15[%c0_51, %c0_52] : memref<16x32xf32, #tpu.memory_space<vmem>>, vector<16x32xf32>
    %c0_53 = arith.constant 0 : index
    %c0_54 = arith.constant 0 : index
    %258 = vector.load %arg6[%c0_53, %c0_54] : memref<32x192xf32, #tpu.memory_space<vmem>>, vector<32x192xf32>
    %cst_55 = arith.constant dense<0.000000e+00> : vector<16x192xf32>
    %259 = tpu.matmul %257, %258, %cst_55 {dimension_numbers = #tpu.dot_dimension_numbers<[1], [0], [0], [1], [0, 0, 1, 1], [], []>} : vector<16x32xf32>, vector<32x192xf32>, vector<16x192xf32> -> vector<16x192xf32>
    %c0_56 = arith.constant 0 : index
    %c0_57 = arith.constant 0 : index
    %260 = vector.load %arg7[%c0_56, %c0_57] : memref<1x192xf32, #tpu.memory_space<vmem>>, vector<1x192xf32>
    %261 = vector.broadcast %260 : vector<1x192xf32> to vector<16x192xf32>
    %262 = arith.addf %259, %261 : vector<16x192xf32>
    %263 = tpu.iota {dimensions = array<i32: 1>} : vector<16x192xi32>
    %c160_i32 = arith.constant 160 : i32
    %264 = vector.broadcast %c160_i32 : i32 to vector<16x192xi32>
    %265 = arith.cmpi slt, %263, %264 : vector<16x192xi32>
    %cst_58 = arith.constant 0.000000e+00 : f32
    %266 = vector.broadcast %cst_58 : f32 to vector<16x192xf32>
    %267 = arith.maximumf %262, %266 : vector<16x192xf32>
    %268 = arith.select %265, %267, %262 : vector<16x192xi1>, vector<16x192xf32>
    %c0_59 = arith.constant 0 : index
    %c0_60 = arith.constant 0 : index
    %269 = vector.load %arg8[%c0_59, %c0_60] : memref<192x20xf32, #tpu.memory_space<vmem>>, vector<192x20xf32>
    %cst_61 = arith.constant dense<0.000000e+00> : vector<16x20xf32>
    %270 = tpu.matmul %268, %269, %cst_61 {dimension_numbers = #tpu.dot_dimension_numbers<[1], [0], [0], [1], [0, 0, 1, 1], [], []>} : vector<16x192xf32>, vector<192x20xf32>, vector<16x20xf32> -> vector<16x20xf32>
    %c0_62 = arith.constant 0 : index
    %c0_63 = arith.constant 0 : index
    %271 = vector.load %arg9[%c0_62, %c0_63] : memref<1x20xf32, #tpu.memory_space<vmem>>, vector<1x20xf32>
    %272 = vector.broadcast %271 : vector<1x20xf32> to vector<16x20xf32>
    %273 = arith.addf %270, %272 : vector<16x20xf32>
    %c0_64 = arith.constant 0 : index
    %c0_65 = arith.constant 0 : index
    %274 = vector.load %arg1[%c0_64, %c0_65] : memref<16x1xf32, #tpu.memory_space<vmem>>, vector<16x1xf32>
    %c0_66 = arith.constant 0 : index
    %c0_67 = arith.constant 0 : index
    %275 = vector.load %arg10[%c0_66, %c0_67] : memref<1x20xf32, #tpu.memory_space<vmem>>, vector<1x20xf32>
    %276 = vector.broadcast %274 : vector<16x1xf32> to vector<16x20xf32>
    %277 = vector.broadcast %275 : vector<1x20xf32> to vector<16x20xf32>
    %278 = arith.mulf %276, %277 : vector<16x20xf32>
    %c0_68 = arith.constant 0 : index
    %c0_69 = arith.constant 0 : index
    %279 = vector.load %arg11[%c0_68, %c0_69] : memref<1x20xf32, #tpu.memory_space<vmem>>, vector<1x20xf32>
    %280 = vector.broadcast %279 : vector<1x20xf32> to vector<16x20xf32>
    %281 = arith.subf %278, %280 : vector<16x20xf32>
    %c0_70 = arith.constant 0 : index
    %c0_71 = arith.constant 0 : index
    %282 = vector.load %arg12[%c0_70, %c0_71] : memref<1x20xf32, #tpu.memory_space<vmem>>, vector<1x20xf32>
    %cst_72 = arith.constant 5.000000e-01 : f32
    %283 = vector.broadcast %cst_72 : f32 to vector<16x20xf32>
    %284 = arith.mulf %283, %281 : vector<16x20xf32>
    %285 = arith.mulf %284, %281 : vector<16x20xf32>
    %286 = vector.broadcast %282 : vector<1x20xf32> to vector<16x20xf32>
    %287 = arith.subf %286, %285 : vector<16x20xf32>
    %288 = arith.addf %273, %287 : vector<16x20xf32>
    %cst_73 = arith.constant dense<0xFF800000> : vector<16xf32>
    %289 = vector.multi_reduction <maximumf>, %288, %cst_73 [1] : vector<16x20xf32> to vector<16xf32>
    %290 = vector.shape_cast %289 : vector<16xf32> to vector<16x1xf32>
    %291 = vector.broadcast %290 : vector<16x1xf32> to vector<16x20xf32>
    %292 = arith.subf %288, %291 : vector<16x20xf32>
    %293 = math.exp %292 : vector<16x20xf32>
    %c0_74 = arith.constant 0 : index
    %c0_75 = arith.constant 0 : index
    %294 = vector.load %arg13[%c0_74, %c0_75] : memref<20x4xf32, #tpu.memory_space<vmem>>, vector<20x4xf32>
    %cst_76 = arith.constant dense<0.000000e+00> : vector<16x4xf32>
    %295 = tpu.matmul %293, %294, %cst_76 {dimension_numbers = #tpu.dot_dimension_numbers<[1], [0], [0], [1], [0, 0, 1, 1], [], []>} : vector<16x20xf32>, vector<20x4xf32>, vector<16x4xf32> -> vector<16x4xf32>
    %296 = math.log %295 : vector<16x4xf32>
    %297 = vector.broadcast %290 : vector<16x1xf32> to vector<16x4xf32>
    %298 = arith.addf %296, %297 : vector<16x4xf32>
    %cst_77 = arith.constant 0.000000e+00 : f32
    %299 = vector.broadcast %cst_77 : f32 to vector<16x104xf32>
    %300 = tpu.concatenate %273, %298, %299 in 1 : vector<16x20xf32>, vector<16x4xf32>, vector<16x104xf32> -> vector<16x128xf32>
    %c0_78 = arith.constant 0 : index
    %c0_79 = arith.constant 0 : index
    %301 = vector.load %arg14[%c0_78, %c0_79] : memref<16x128xf32, #tpu.memory_space<vmem>>, vector<16x128xf32>
    tpu.vector_store %arg14[%c0_78, %c0_79], %300 {strides = array<i32>} : memref<16x128xf32, #tpu.memory_space<vmem>>, vector<16x128xf32>,
    return
  }
}

</mosaic_0001>

<llo_original>
// kernel: erpp_forward.1
$region0: #{erpp_forward.1}
  #allocation0 [shape = 'u32[]', space=smem, size = 0x4, offset = 0x4, fixed_abs, tag = 'smem constant byte address 0x4 - core index']
  #allocation1 [shape = 'u32[144,128]{1,0:T(1,128)}', space=vmem, size = 0x12000, scoped, tag = 'internal scratch']
  #allocation2 [shape = 'f32[16,32]{1,0:T(8,128)}', space=vmem, size = 0x2000, scoped, tag = 'scratch operand']
  %s0 = inlined_call_operand.vmem [shape: f32[16,33], index: 0, kind: input, shape index: {}]
  %s1 = inlined_call_operand.vmem [shape: f32[16,1], index: 1, kind: input, shape index: {}]
  %s2 = inlined_call_operand.vmem [shape: f32[33,96], index: 2, kind: input, shape index: {}]
  %s3 = inlined_call_operand.vmem [shape: f32[1,96], index: 3, kind: input, shape index: {}]
  %s4 = inlined_call_operand.vmem [shape: f32[32,96], index: 4, kind: input, shape index: {}]
  %s5 = inlined_call_operand.vmem [shape: f32[1,32], index: 5, kind: input, shape index: {}]
  %s6 = inlined_call_operand.vmem [shape: f32[32,192], index: 6, kind: input, shape index: {}]
  %s7 = inlined_call_operand.vmem [shape: f32[1,192], index: 7, kind: input, shape index: {}]
  %s8 = inlined_call_operand.vmem [shape: f32[192,20], index: 8, kind: input, shape index: {}]
  %s9 = inlined_call_operand.vmem [shape: f32[1,20], index: 9, kind: input, shape index: {}]
  %s10 = inlined_call_operand.vmem [shape: f32[1,20], index: 10, kind: input, shape index: {}]
  %s11 = inlined_call_operand.vmem [shape: f32[1,20], index: 11, kind: input, shape index: {}]
  %s12 = inlined_call_operand.vmem [shape: f32[1,20], index: 12, kind: input, shape index: {}]
  %s13 = inlined_call_operand.vmem [shape: f32[20,4], index: 13, kind: input, shape index: {}]
  %s14 = inlined_call_operand.vmem [shape: f32[16,128], index: 14, kind: output, shape index: {}]
  %s15 = sld [smem:[#allocation0]]
  $region66: #{erpp_forward.1} parent=0
    _
  %s17 = ssub.s32 1, %s15
  %s18 = scalar_select 0, %s17, %s15
  // Predicated region
  $region2: #{erpp_forward.1} parent=0 // pred_check
    _
  $region3: #{erpp_forward.1} parent=0 // pred_check_branch
    %20 = sbr.rel (0) target = $region5
  $region4: #{erpp_forward.1} parent=0 // pred_region
    _
  $region5: #{erpp_forward.1} parent=0 // pred_fallthru
    _
  // Predicated region
  $region6: #{erpp_forward.1} parent=0 // pred_check
    _
  $region7: #{erpp_forward.1} parent=0 // pred_check_branch
    %22 = sbr.rel (0) target = $region9
  $region8: #{erpp_forward.1} parent=0 // pred_region
    _
  $region9: #{erpp_forward.1} parent=0 // pred_fallthru
    _
  // Predicated region
  $region10: #{erpp_forward.1} parent=0 // pred_check
    _
  $region11: #{erpp_forward.1} parent=0 // pred_check_branch
    %24 = sbr.rel (0) target = $region13
  $region12: #{erpp_forward.1} parent=0 // pred_region
    _
  $region13: #{erpp_forward.1} parent=0 // pred_fallthru
    _
  // Predicated region
  $region14: #{erpp_forward.1} parent=0 // pred_check
    _
  $region15: #{erpp_forward.1} parent=0 // pred_check_branch
    %26 = sbr.rel (0) target = $region17
  $region16: #{erpp_forward.1} parent=0 // pred_region
    _
  $region17: #{erpp_forward.1} parent=0 // pred_fallthru
    _
  // Predicated region
  $region18: #{erpp_forward.1} parent=0 // pred_check
    _
  $region19: #{erpp_forward.1} parent=0 // pred_check_branch
    %28 = sbr.rel (0) target = $region21
  $region20: #{erpp_forward.1} parent=0 // pred_region
    _
  $region21: #{erpp_forward.1} parent=0 // pred_fallthru
    _
  // Predicated region
  $region22: #{erpp_forward.1} parent=0 // pred_check
    _
  $region23: #{erpp_forward.1} parent=0 // pred_check_branch
    %30 = sbr.rel (0) target = $region25
  $region24: #{erpp_forward.1} parent=0 // pred_region
    _
  $region25: #{erpp_forward.1} parent=0 // pred_fallthru
    _
  // Predicated region
  $region26: #{erpp_forward.1} parent=0 // pred_check
    _
  $region27: #{erpp_forward.1} parent=0 // pred_check_branch
    %32 = sbr.rel (0) target = $region29
  $region28: #{erpp_forward.1} parent=0 // pred_region
    _
  $region29: #{erpp_forward.1} parent=0 // pred_fallthru
    _
  // Predicated region
  $region30: #{erpp_forward.1} parent=0 // pred_check
    _
  $region31: #{erpp_forward.1} parent=0 // pred_check_branch
    %34 = sbr.rel (0) target = $region33
  $region32: #{erpp_forward.1} parent=0 // pred_region
    _
  $region33: #{erpp_forward.1} parent=0 // pred_fallthru
    _
  // Predicated region
  $region34: #{erpp_forward.1} parent=0 // pred_check
    _
  $region35: #{erpp_forward.1} parent=0 // pred_check_branch
    %36 = sbr.rel (0) target = $region37
  $region36: #{erpp_forward.1} parent=0 // pred_region
    _
  $region37: #{erpp_forward.1} parent=0 // pred_fallthru
    _
  // Predicated region
  $region38: #{erpp_forward.1} parent=0 // pred_check
    _
  $region39: #{erpp_forward.1} parent=0 // pred_check_branch
    %38 = sbr.rel (0) target = $region41
  $region40: #{erpp_forward.1} parent=0 // pred_region
    _
  $region41: #{erpp_forward.1} parent=0 // pred_fallthru
    _
  // Predicated region
  $region42: #{erpp_forward.1} parent=0 // pred_check
    _
  $region43: #{erpp_forward.1} parent=0 // pred_check_branch
    %40 = sbr.rel (0) target = $region45
  $region44: #{erpp_forward.1} parent=0 // pred_region
    _
  $region45: #{erpp_forward.1} parent=0 // pred_fallthru
    _
  // Predicated region
  $region46: #{erpp_forward.1} parent=0 // pred_check
    _
  $region47: #{erpp_forward.1} parent=0 // pred_check_branch
    %42 = sbr.rel (0) target = $region49
  $region48: #{erpp_forward.1} parent=0 // pred_region
    _
  $region49: #{erpp_forward.1} parent=0 // pred_fallthru
    _
  // Predicated region
  $region50: #{erpp_forward.1} parent=0 // pred_check
    _
  $region51: #{erpp_forward.1} parent=0 // pred_check_branch
    %44 = sbr.rel (0) target = $region53
  $region52: #{erpp_forward.1} parent=0 // pred_region
    _
  $region53: #{erpp_forward.1} parent=0 // pred_fallthru
    _
  // Predicated region
  $region54: #{erpp_forward.1} parent=0 // pred_check
    _
  $region55: #{erpp_forward.1} parent=0 // pred_check_branch
    %46 = sbr.rel (0) target = $region57
  $region56: #{erpp_forward.1} parent=0 // pred_region
    _
  $region57: #{erpp_forward.1} parent=0 // pred_fallthru
    _
  %v47 = vld [vmem:[%s0] sm:$0xff]
  %v48 = vld [vmem:[%s0 + $0x8] sm:$0xff]
  %v49 = vld [vmem:[%s2] sm:$0xff]
  %v50 = vld [vmem:[%s2 + $0x8] sm:$0xff]
  %v51 = vld [vmem:[%s2 + $0x10] sm:$0xff]
  %v52 = vld [vmem:[%s2 + $0x18] sm:$0xff]
  %v53 = vld [vmem:[%s2 + $0x20] sm:$0x1]
  %v54 = vld [vmem:[%s3] sm:$0x1]
  %v56 = vlaneseq
  %v57 = vshrl.u32 %v56, 7
  %v58 = vsub.s32 0, %v57
  %v59 = vrot.slane %v54, %v58
  %vm61 = vcmask 269312
  %v63 = vsel %vm61, %v47, 0
  %v66 = vsel %vm61, %v48, 0
  %vm68 = vcmask 1040384
  %v70 = vsel %vm68, %v53, 0
  %72 = vmatprep.subr.mxu0 0.0
  %73 = vmatpush1.msra.mxu0 0.0
  %74 = vmatprep.subr.mxu0 0.0
  %75 = vmatpush1.msra.mxu0 0.0
  %76 = vmatprep.subr.mxu0 0.0
  %77 = vmatpush1.msra.mxu0 0.0
  %78 = vmatprep.subr.mxu0 0.0
  %79 = vmatpush1.msra.mxu0 0.0
  %80 = vmatprep.subr.mxu0 0.0
  %81 = vmatpush1.msra.mxu0 0.0
  %82 = vmatprep.subr.mxu0 0.0
  %83 = vmatpush1.msra.mxu0 0.0
  %84 = vmatprep.subr.mxu0 0.0
  %85 = vmatpush1.msra.mxu0 0.0
  %86 = vmatprep.subr.mxu0 0.0
  %87 = vmatpush1.msra.mxu0 0.0
  %88 = vmatprep.subr.mxu0 0.0
  %89 = vmatpush1.msra.mxu0 0.0
  %90 = vmatprep.subr.mxu0 0.0
  %91 = vmatpush1.msra.mxu0 0.0
  %92 = vmatprep.subr.mxu0 0.0
  %93 = vmatpush1.msra.mxu0 0.0
  %94 = vmatprep.subr.mxu0 0.0
  %95 = vmatpush1.msra.mxu0 %v70
  %96 = vmatprep.subr.mxu0 0.0
  %97 = vmatpush1.msra.mxu0 %v52
  %98 = vmatprep.subr.mxu0 0.0
  %99 = vmatpush1.msra.mxu0 %v51
  %100 = vmatprep.subr.mxu0 0.0
  %101 = vmatpush1.msra.mxu0 %v50
  %102 = vmatprep.subr.mxu0 0.0
  %103 = vmatpush1.msra.mxu0 %v49
  %104 = vmatprep.subr.mxu0 0.0
  %105 = vmatpush2.msra.mxu0 0.0
  %106 = vmatprep.subr.mxu0 0.0
  %107 = vmatpush2.msra.mxu0 0.0
  %108 = vmatprep.subr.mxu0 0.0
  %109 = vmatpush2.msra.mxu0 0.0
  %110 = vmatprep.subr.mxu0 0.0
  %111 = vmatpush2.msra.mxu0 0.0
  %112 = vmatprep.subr.mxu0 0.0
  %113 = vmatpush2.msra.mxu0 0.0
  %114 = vmatprep.subr.mxu0 0.0
  %115 = vmatpush2.msra.mxu0 0.0
  %116 = vmatprep.subr.mxu0 0.0
  %117 = vmatpush2.msra.mxu0 0.0
  %118 = vmatprep.subr.mxu0 0.0
  %119 = vmatpush2.msra.mxu0 0.0
  %120 = vmatprep.subr.mxu0 0.0
  %121 = vmatpush2.msra.mxu0 0.0
  %122 = vmatprep.subr.mxu0 0.0
  %123 = vmatpush2.msra.mxu0 0.0
  %124 = vmatprep.subr.mxu0 0.0
  %125 = vmatpush2.msra.mxu0 0.0
  %126 = vmatprep.subr.mxu0 0.0
  %127 = vmatpush2.msra.mxu0 0.0
  %128 = vmatprep.subr.mxu0 0.0
  %129 = vmatpush2.msra.mxu0 0.0
  %130 = vmatprep.subr.mxu0 0.0
  %131 = vmatpush2.msra.mxu0 0.0
  %132 = vmatprep.subr.mxu0 0.0
  %133 = vmatpush2.msra.mxu0 0.0
  %134 = vmatprep.subr.mxu0 0.0
  %135 = vmatpush2.msra.mxu0 0.0
  %136 = vmatprep.mubr.f32.mxu0 0.0
  %137 = vmatmul.mubr.f32.gmra.mxu0 %v63
  %v138 = vpop.f32.mrf.mxu0
  %v139 = vadd.f32 %v59, %v138
  %v140 = vpop.f32.mrf.mxu0
  %141 = vmatprep.mubr.f32.mxu0 0.0
  %142 = vmatmul.mubr.f32.gmra.mxu0 %v66
  %v143 = vpop.f32.mrf.mxu0
  %v144 = vadd.f32 %v59, %v143
  %v145 = vpop.f32.mrf.mxu0
  %146 = vdwg.mxu0
  %v147 = vld [vmem:[%s4] sm:$0xff]
  %v148 = vld [vmem:[%s4 + $0x8] sm:$0xff]
  %v149 = vld [vmem:[%s4 + $0x10] sm:$0xff]
  %v150 = vld [vmem:[%s4 + $0x18] sm:$0xff]
  %v151 = vld [vmem:[%s5] sm:$0x1]
  %vm152 = vcmask 261120
  %v154 = vsel %vm152, 0.0, 0
  %156 = vmatprep.subr.mxu0 0.0
  %157 = vmatpush1.msra.mxu0 0.0
  %158 = vmatprep.subr.mxu0 0.0
  %159 = vmatpush1.msra.mxu0 0.0
  %160 = vmatprep.subr.mxu0 0.0
  %161 = vmatpush1.msra.mxu0 0.0
  %162 = vmatprep.subr.mxu0 0.0
  %163 = vmatpush1.msra.mxu0 0.0
  %164 = vmatprep.subr.mxu0 0.0
  %165 = vmatpush1.msra.mxu0 0.0
  %166 = vmatprep.subr.mxu0 0.0
  %167 = vmatpush1.msra.mxu0 0.0
  %168 = vmatprep.subr.mxu0 0.0
  %169 = vmatpush1.msra.mxu0 0.0
  %170 = vmatprep.subr.mxu0 0.0
  %171 = vmatpush1.msra.mxu0 0.0
  %172 = vmatprep.subr.mxu0 0.0
  %173 = vmatpush1.msra.mxu0 0.0
  %174 = vmatprep.subr.mxu0 0.0
  %175 = vmatpush1.msra.mxu0 0.0
  %176 = vmatprep.subr.mxu0 0.0
  %177 = vmatpush1.msra.mxu0 0.0
  %178 = vmatprep.subr.mxu0 0.0
  %179 = vmatpush1.msra.mxu0 0.0
  %180 = vmatprep.subr.mxu0 0.0
  %181 = vmatpush1.msra.mxu0 %v150
  %182 = vmatprep.subr.mxu0 0.0
  %183 = vmatpush1.msra.mxu0 %v149
  %184 = vmatprep.subr.mxu0 0.0
  %185 = vmatpush1.msra.mxu0 %v148
  %186 = vmatprep.subr.mxu0 0.0
  %187 = vmatpush1.msra.mxu0 %v147
  %188 = vmatprep.subr.mxu0 0.0
  %189 = vmatpush2.msra.mxu0 0.0
  %190 = vmatprep.subr.mxu0 0.0
  %191 = vmatpush2.msra.mxu0 0.0
  %192 = vmatprep.subr.mxu0 0.0
  %193 = vmatpush2.msra.mxu0 0.0
  %194 = vmatprep.subr.mxu0 0.0
  %195 = vmatpush2.msra.mxu0 0.0
  %196 = vmatprep.subr.mxu0 0.0
  %197 = vmatpush2.msra.mxu0 0.0
  %198 = vmatprep.subr.mxu0 0.0
  %199 = vmatpush2.msra.mxu0 0.0
  %200 = vmatprep.subr.mxu0 0.0
  %201 = vmatpush2.msra.mxu0 0.0
  %202 = vmatprep.subr.mxu0 0.0
  %203 = vmatpush2.msra.mxu0 0.0
  %204 = vmatprep.subr.mxu0 0.0
  %205 = vmatpush2.msra.mxu0 0.0
  %206 = vmatprep.subr.mxu0 0.0
  %207 = vmatpush2.msra.mxu0 0.0
  %208 = vmatprep.subr.mxu0 0.0
  %209 = vmatpush2.msra.mxu0 0.0
  %210 = vmatprep.subr.mxu0 0.0
  %211 = vmatpush2.msra.mxu0 0.0
  %212 = vmatprep.subr.mxu0 0.0
  %213 = vmatpush2.msra.mxu0 0.0
  %214 = vmatprep.subr.mxu0 0.0
  %215 = vmatpush2.msra.mxu0 0.0
  %216 = vmatprep.subr.mxu0 0.0
  %217 = vmatpush2.msra.mxu0 0.0
  %218 = vmatprep.subr.mxu0 0.0
  %219 = vmatpush2.msra.mxu0 0.0
  %220 = vmatprep.mubr.f32.mxu0 0.0
  %221 = vmatmul.mubr.f32.gmra.mxu0 %v154
  %v222 = vpop.f32.mrf.mxu0
  %v223 = vadd.f32 0.0, %v222
  %v224 = vpop.f32.mrf.mxu0
  %225 = vdwg.mxu0
  %v226 = vadd.f32 %v139, %v223
  %v227 = vxor.u32 %v226, 2147483648
  %v228 = vmul.f32 %v227, 1.442695
  %v229 = vpow.pop %v228
  %v230 = vadd.f32 %v229, 1.0
  %v231 = vrcp.pop %v230
  %v232 = vmul.f32 1.0, %v231
  %v234 = vlaneseq
  %v235 = vshrl.u32 %v234, 7
  %v236 = vsub.s32 0, %v235
  %v237 = vrot.slane %v151, %v236
  %238 = vrot.lane.b32.xlu0 %v237, 64
  %v239 = vpop.permute.xlu0 %238
  %v241 = vadd.f32 %v223, %v239
  %243 = vrot.lane.b32.xlu0 %v241, 64
  %v244 = vpop.permute.xlu0 %243
  %v246 = vmul.f32 %v232, %v244
  %248 = vrot.lane.b32.xlu0 %v246, 64
  %v249 = vpop.permute.xlu0 %248
  %v251 = vadd.f32 %v139, %v249
  %v252 = vtanh.pop %v251
  %v253 = vsub.f32 1.0, %v232
  %255 = vrot.lane.b32.xlu0 %v252, 96
  %v256 = vpop.permute.xlu0 %255
  %v258 = vmul.f32 %v253, %v256
  %v259 = vmul.f32 %v232, 0.0
  %v260 = vadd.f32 %v258, %v259
  %262 = vrot.lane.b32.xlu0 %v260, 96
  %v263 = vpop.permute.xlu0 %262
  %vm265 = vcmask 254976
  %266 = vst.msk [vmem:[#allocation2] sm:$0x3] %vm265, %v263
  %v267 = vsel %vm152, %v263, 0
  %269 = vmatprep.subr.mxu0 0.0
  %270 = vmatpush1.msra.mxu0 0.0
  %271 = vmatprep.subr.mxu0 0.0
  %272 = vmatpush1.msra.mxu0 0.0
  %273 = vmatprep.subr.mxu0 0.0
  %274 = vmatpush1.msra.mxu0 0.0
  %275 = vmatprep.subr.mxu0 0.0
  %276 = vmatpush1.msra.mxu0 0.0
  %277 = vmatprep.subr.mxu0 0.0
  %278 = vmatpush1.msra.mxu0 0.0
  %279 = vmatprep.subr.mxu0 0.0
  %280 = vmatpush1.msra.mxu0 0.0
  %281 = vmatprep.subr.mxu0 0.0
  %282 = vmatpush1.msra.mxu0 0.0
  %283 = vmatprep.subr.mxu0 0.0
  %284 = vmatpush1.msra.mxu0 0.0
  %285 = vmatprep.subr.mxu0 0.0
  %286 = vmatpush1.msra.mxu0 0.0
  %287 = vmatprep.subr.mxu0 0.0
  %288 = vmatpush1.msra.mxu0 0.0
  %289 = vmatprep.subr.mxu0 0.0
  %290 = vmatpush1.msra.mxu0 0.0
  %291 = vmatprep.subr.mxu0 0.0
  %292 = vmatpush1.msra.mxu0 0.0
  %293 = vmatprep.subr.mxu0 0.0
  %294 = vmatpush1.msra.mxu0 %v150
  %295 = vmatprep.subr.mxu0 0.0
  %296 = vmatpush1.msra.mxu0 %v149
  %297 = vmatprep.subr.mxu0 0.0
  %298 = vmatpush1.msra.mxu0 %v148
  %299 = vmatprep.subr.mxu0 0.0
  %300 = vmatpush1.msra.mxu0 %v147
  %301 = vmatprep.subr.mxu0 0.0
  %302 = vmatpush2.msra.mxu0 0.0
  %303 = vmatprep.subr.mxu0 0.0
  %304 = vmatpush2.msra.mxu0 0.0
  %305 = vmatprep.subr.mxu0 0.0
  %306 = vmatpush2.msra.mxu0 0.0
  %307 = vmatprep.subr.mxu0 0.0
  %308 = vmatpush2.msra.mxu0 0.0
  %309 = vmatprep.subr.mxu0 0.0
  %310 = vmatpush2.msra.mxu0 0.0
  %311 = vmatprep.subr.mxu0 0.0
  %312 = vmatpush2.msra.mxu0 0.0
  %313 = vmatprep.subr.mxu0 0.0
  %314 = vmatpush2.msra.mxu0 0.0
  %315 = vmatprep.subr.mxu0 0.0
  %316 = vmatpush2.msra.mxu0 0.0
  %317 = vmatprep.subr.mxu0 0.0
  %318 = vmatpush2.msra.mxu0 0.0
  %319 = vmatprep.subr.mxu0 0.0
  %320 = vmatpush2.msra.mxu0 0.0
  %321 = vmatprep.subr.mxu0 0.0
  %322 = vmatpush2.msra.mxu0 0.0
  %323 = vmatprep.subr.mxu0 0.0
  %324 = vmatpush2.msra.mxu0 0.0
  %325 = vmatprep.subr.mxu0 0.0
  %326 = vmatpush2.msra.mxu0 0.0
  %327 = vmatprep.subr.mxu0 0.0
  %328 = vmatpush2.msra.mxu0 0.0
  %329 = vmatprep.subr.mxu0 0.0
  %330 = vmatpush2.msra.mxu0 0.0
  %331 = vmatprep.subr.mxu0 0.0
  %332 = vmatpush2.msra.mxu0 0.0
  %333 = vmatprep.mubr.f32.mxu0 0.0
  %334 = vmatmul.mubr.f32.gmra.mxu0 %v267
  %v335 = vpop.f32.mrf.mxu0
  %v336 = vadd.f32 0.0, %v335
  %v337 = vpop.f32.mrf.mxu0
  %338 = vdwg.mxu0
  %v340 = vrot.slane %v336, 6
  %v342 = vadd.f32 %v139, %v340
  %v343 = vxor.u32 %v342, 2147483648
  %v344 = vmul.f32 %v343, 1.442695
  %v345 = vpow.pop %v344
  %v346 = vadd.f32 %v345, 1.0
  %v347 = vrcp.pop %v346
  %v348 = vmul.f32 1.0, %v347
  %v349 = vadd.f32 %v336, %v239
  %v351 = vrot.slane %v349, 6
  %352 = vrot.lane.b32.xlu0 %v351, 64
  %v353 = vpop.permute.xlu0 %352
  %v355 = vmul.f32 %v348, %v353
  %357 = vrot.lane.b32.xlu0 %v355, 64
  %v358 = vpop.permute.xlu0 %357
  %v360 = vadd.f32 %v139, %v358
  %v361 = vtanh.pop %v360
  %v362 = vsub.f32 1.0, %v348
  %364 = vrot.lane.b32.xlu0 %v361, 96
  %v365 = vpop.permute.xlu0 %364
  %v367 = vmul.f32 %v362, %v365
  %v368 = vrot.slane %v260, 6
  %v370 = vmul.f32 %v348, %v368
  %v371 = vadd.f32 %v367, %v370
  %373 = vrot.lane.b32.xlu0 %v371, 96
  %v374 = vpop.permute.xlu0 %373
  %vm376 = vcmask 257026
  %377 = vst.msk [vmem:[#allocation2] sm:$0xc] %vm376, %v374
  %v378 = vrot.slane %v371, 2
  %379 = vrot.lane.b32.xlu0 %v378, 96
  %v380 = vpop.permute.xlu0 %379
  %v381 = vsel %vm152, %v380, 0
  %383 = vmatprep.subr.mxu0 0.0
  %384 = vmatpush1.msra.mxu0 0.0
  %385 = vmatprep.subr.mxu0 0.0
  %386 = vmatpush1.msra.mxu0 0.0
  %387 = vmatprep.subr.mxu0 0.0
  %388 = vmatpush1.msra.mxu0 0.0
  %389 = vmatprep.subr.mxu0 0.0
  %390 = vmatpush1.msra.mxu0 0.0
  %391 = vmatprep.subr.mxu0 0.0
  %392 = vmatpush1.msra.mxu0 0.0
  %393 = vmatprep.subr.mxu0 0.0
  %394 = vmatpush1.msra.mxu0 0.0
  %395 = vmatprep.subr.mxu0 0.0
  %396 = vmatpush1.msra.mxu0 0.0
  %397 = vmatprep.subr.mxu0 0.0
  %398 = vmatpush1.msra.mxu0 0.0
  %399 = vmatprep.subr.mxu0 0.0
  %400 = vmatpush1.msra.mxu0 0.0
  %401 = vmatprep.subr.mxu0 0.0
  %402 = vmatpush1.msra.mxu0 0.0
  %403 = vmatprep.subr.mxu0 0.0
  %404 = vmatpush1.msra.mxu0 0.0
  %405 = vmatprep.subr.mxu0 0.0
  %406 = vmatpush1.msra.mxu0 0.0
  %407 = vmatprep.subr.mxu0 0.0
  %408 = vmatpush1.msra.mxu0 %v150
  %409 = vmatprep.subr.mxu0 0.0
  %410 = vmatpush1.msra.mxu0 %v149
  %411 = vmatprep.subr.mxu0 0.0
  %412 = vmatpush1.msra.mxu0 %v148
  %413 = vmatprep.subr.mxu0 0.0
  %414 = vmatpush1.msra.mxu0 %v147
  %415 = vmatprep.subr.mxu0 0.0
  %416 = vmatpush2.msra.mxu0 0.0
  %417 = vmatprep.subr.mxu0 0.0
  %418 = vmatpush2.msra.mxu0 0.0
  %419 = vmatprep.subr.mxu0 0.0
  %420 = vmatpush2.msra.mxu0 0.0
  %421 = vmatprep.subr.mxu0 0.0
  %422 = vmatpush2.msra.mxu0 0.0
  %423 = vmatprep.subr.mxu0 0.0
  %424 = vmatpush2.msra.mxu0 0.0
  %425 = vmatprep.subr.mxu0 0.0
  %426 = vmatpush2.msra.mxu0 0.0
  %427 = vmatprep.subr.mxu0 0.0
  %428 = vmatpush2.msra.mxu0 0.0
  %429 = vmatprep.subr.mxu0 0.0
  %430 = vmatpush2.msra.mxu0 0.0
  %431 = vmatprep.subr.mxu0 0.0
  %432 = vmatpush2.msra.mxu0 0.0
  %433 = vmatprep.subr.mxu0 0.0
  %434 = vmatpush2.msra.mxu0 0.0
  %435 = vmatprep.subr.mxu0 0.0
  %436 = vmatpush2.msra.mxu0 0.0
  %437 = vmatprep.subr.mxu0 0.0
  %438 = vmatpush2.msra.mxu0 0.0
  %439 = vmatprep.subr.mxu0 0.0
  %440 = vmatpush2.msra.mxu0 0.0
  %441 = vmatprep.subr.mxu0 0.0
  %442 = vmatpush2.msra.mxu0 0.0
  %443 = vmatprep.subr.mxu0 0.0
  %444 = vmatpush2.msra.mxu0 0.0
  %445 = vmatprep.subr.mxu0 0.0
  %446 = vmatpush2.msra.mxu0 0.0
  %447 = vmatprep.mubr.f32.mxu0 0.0
  %448 = vmatmul.mubr.f32.gmra.mxu0 %v381
  %v449 = vpop.f32.mrf.mxu0
  %v450 = vadd.f32 0.0, %v449
  %v451 = vpop.f32.mrf.mxu0
  %452 = vdwg.mxu0
  %v454 = vrot.slane %v450, 4
  %v456 = vadd.f32 %v139, %v454
  %v457 = vxor.u32 %v456, 2147483648
  %v458 = vmul.f32 %v457, 1.442695
  %v459 = vpow.pop %v458
  %v460 = vadd.f32 %v459, 1.0
  %v461 = vrcp.pop %v460
  %v462 = vmul.f32 1.0, %v461
  %v463 = vadd.f32 %v450, %v239
  %v465 = vrot.slane %v463, 4
  %466 = vrot.lane.b32.xlu0 %v465, 64
  %v467 = vpop.permute.xlu0 %466
  %v469 = vmul.f32 %v462, %v467
  %471 = vrot.lane.b32.xlu0 %v469, 64
  %v472 = vpop.permute.xlu0 %471
  %v474 = vadd.f32 %v139, %v472
  %v475 = vtanh.pop %v474
  %v476 = vsub.f32 1.0, %v462
  %478 = vrot.lane.b32.xlu0 %v475, 96
  %v479 = vpop.permute.xlu0 %478
  %v481 = vmul.f32 %v476, %v479
  %v482 = vrot.slane %v371, 6
  %v484 = vmul.f32 %v462, %v482
  %v485 = vadd.f32 %v481, %v484
  %487 = vrot.lane.b32.xlu0 %v485, 96
  %v488 = vpop.permute.xlu0 %487
  %vm490 = vcmask 259076
  %491 = vst.msk [vmem:[#allocation2] sm:$0x30] %vm490, %v488
  %v492 = vrot.slane %v485, 4
  %493 = vrot.lane.b32.xlu0 %v492, 96
  %v494 = vpop.permute.xlu0 %493
  %v495 = vsel %vm152, %v494, 0
  %497 = vmatprep.subr.mxu0 0.0
  %498 = vmatpush1.msra.mxu0 0.0
  %499 = vmatprep.subr.mxu0 0.0
  %500 = vmatpush1.msra.mxu0 0.0
  %501 = vmatprep.subr.mxu0 0.0
  %502 = vmatpush1.msra.mxu0 0.0
  %503 = vmatprep.subr.mxu0 0.0
  %504 = vmatpush1.msra.mxu0 0.0
  %505 = vmatprep.subr.mxu0 0.0
  %506 = vmatpush1.msra.mxu0 0.0
  %507 = vmatprep.subr.mxu0 0.0
  %508 = vmatpush1.msra.mxu0 0.0
  %509 = vmatprep.subr.mxu0 0.0
  %510 = vmatpush1.msra.mxu0 0.0
  %511 = vmatprep.subr.mxu0 0.0
  %512 = vmatpush1.msra.mxu0 0.0
  %513 = vmatprep.subr.mxu0 0.0
  %514 = vmatpush1.msra.mxu0 0.0
  %515 = vmatprep.subr.mxu0 0.0
  %516 = vmatpush1.msra.mxu0 0.0
  %517 = vmatprep.subr.mxu0 0.0
  %518 = vmatpush1.msra.mxu0 0.0
  %519 = vmatprep.subr.mxu0 0.0
  %520 = vmatpush1.msra.mxu0 0.0
  %521 = vmatprep.subr.mxu0 0.0
  %522 = vmatpush1.msra.mxu0 %v150
  %523 = vmatprep.subr.mxu0 0.0
  %524 = vmatpush1.msra.mxu0 %v149
  %525 = vmatprep.subr.mxu0 0.0
  %526 = vmatpush1.msra.mxu0 %v148
  %527 = vmatprep.subr.mxu0 0.0
  %528 = vmatpush1.msra.mxu0 %v147
  %529 = vmatprep.subr.mxu0 0.0
  %530 = vmatpush2.msra.mxu0 0.0
  %531 = vmatprep.subr.mxu0 0.0
  %532 = vmatpush2.msra.mxu0 0.0
  %533 = vmatprep.subr.mxu0 0.0
  %534 = vmatpush2.msra.mxu0 0.0
  %535 = vmatprep.subr.mxu0 0.0
  %536 = vmatpush2.msra.mxu0 0.0
  %537 = vmatprep.subr.mxu0 0.0
  %538 = vmatpush2.msra.mxu0 0.0
  %539 = vmatprep.subr.mxu0 0.0
  %540 = vmatpush2.msra.mxu0 0.0
  %541 = vmatprep.subr.mxu0 0.0
  %542 = vmatpush2.msra.mxu0 0.0
  %543 = vmatprep.subr.mxu0 0.0
  %544 = vmatpush2.msra.mxu0 0.0
  %545 = vmatprep.subr.mxu0 0.0
  %546 = vmatpush2.msra.mxu0 0.0
  %547 = vmatprep.subr.mxu0 0.0
  %548 = vmatpush2.msra.mxu0 0.0
  %549 = vmatprep.subr.mxu0 0.0
  %550 = vmatpush2.msra.mxu0 0.0
  %551 = vmatprep.subr.mxu0 0.0
  %552 = vmatpush2.msra.mxu0 0.0
  %553 = vmatprep.subr.mxu0 0.0
  %554 = vmatpush2.msra.mxu0 0.0
  %555 = vmatprep.subr.mxu0 0.0
  %556 = vmatpush2.msra.mxu0 0.0
  %557 = vmatprep.subr.mxu0 0.0
  %558 = vmatpush2.msra.mxu0 0.0
  %559 = vmatprep.subr.mxu0 0.0
  %560 = vmatpush2.msra.mxu0 0.0
  %561 = vmatprep.mubr.f32.mxu0 0.0
  %562 = vmatmul.mubr.f32.gmra.mxu0 %v495
  %v563 = vpop.f32.mrf.mxu0
  %v564 = vadd.f32 0.0, %v563
  %v565 = vpop.f32.mrf.mxu0
  %566 = vdwg.mxu0
  %v568 = vrot.slane %v564, 2
  %v570 = vadd.f32 %v139, %v568
  %v571 = vxor.u32 %v570, 2147483648
  %v572 = vmul.f32 %v571, 1.442695
  %v573 = vpow.pop %v572
  %v574 = vadd.f32 %v573, 1.0
  %v575 = vrcp.pop %v574
  %v576 = vmul.f32 1.0, %v575
  %v577 = vadd.f32 %v564, %v239
  %v579 = vrot.slane %v577, 2
  %580 = vrot.lane.b32.xlu0 %v579, 64
  %v581 = vpop.permute.xlu0 %580
  %v583 = vmul.f32 %v576, %v581
  %585 = vrot.lane.b32.xlu0 %v583, 64
  %v586 = vpop.permute.xlu0 %585
  %v588 = vadd.f32 %v139, %v586
  %v589 = vtanh.pop %v588
  %v590 = vsub.f32 1.0, %v576
  %592 = vrot.lane.b32.xlu0 %v589, 96
  %v593 = vpop.permute.xlu0 %592
  %v595 = vmul.f32 %v590, %v593
  %v596 = vrot.slane %v485, 6
  %v598 = vmul.f32 %v576, %v596
  %v599 = vadd.f32 %v595, %v598
  %601 = vrot.lane.b32.xlu0 %v599, 96
  %v602 = vpop.permute.xlu0 %601
  %vm604 = vcmask 261126
  %605 = vst.msk [vmem:[#allocation2] sm:$0xc0] %vm604, %v602
  %v606 = vrot.slane %v599, 6
  %607 = vrot.lane.b32.xlu0 %v606, 96
  %v608 = vpop.permute.xlu0 %607
  %v609 = vsel %vm152, %v608, 0
  %611 = vmatprep.subr.mxu0 0.0
  %612 = vmatpush1.msra.mxu0 0.0
  %613 = vmatprep.subr.mxu0 0.0
  %614 = vmatpush1.msra.mxu0 0.0
  %615 = vmatprep.subr.mxu0 0.0
  %616 = vmatpush1.msra.mxu0 0.0
  %617 = vmatprep.subr.mxu0 0.0
  %618 = vmatpush1.msra.mxu0 0.0
  %619 = vmatprep.subr.mxu0 0.0
  %620 = vmatpush1.msra.mxu0 0.0
  %621 = vmatprep.subr.mxu0 0.0
  %622 = vmatpush1.msra.mxu0 0.0
  %623 = vmatprep.subr.mxu0 0.0
  %624 = vmatpush1.msra.mxu0 0.0
  %625 = vmatprep.subr.mxu0 0.0
  %626 = vmatpush1.msra.mxu0 0.0
  %627 = vmatprep.subr.mxu0 0.0
  %628 = vmatpush1.msra.mxu0 0.0
  %629 = vmatprep.subr.mxu0 0.0
  %630 = vmatpush1.msra.mxu0 0.0
  %631 = vmatprep.subr.mxu0 0.0
  %632 = vmatpush1.msra.mxu0 0.0
  %633 = vmatprep.subr.mxu0 0.0
  %634 = vmatpush1.msra.mxu0 0.0
  %635 = vmatprep.subr.mxu0 0.0
  %636 = vmatpush1.msra.mxu0 %v150
  %637 = vmatprep.subr.mxu0 0.0
  %638 = vmatpush1.msra.mxu0 %v149
  %639 = vmatprep.subr.mxu0 0.0
  %640 = vmatpush1.msra.mxu0 %v148
  %641 = vmatprep.subr.mxu0 0.0
  %642 = vmatpush1.msra.mxu0 %v147
  %643 = vmatprep.subr.mxu0 0.0
  %644 = vmatpush2.msra.mxu0 0.0
  %645 = vmatprep.subr.mxu0 0.0
  %646 = vmatpush2.msra.mxu0 0.0
  %647 = vmatprep.subr.mxu0 0.0
  %648 = vmatpush2.msra.mxu0 0.0
  %649 = vmatprep.subr.mxu0 0.0
  %650 = vmatpush2.msra.mxu0 0.0
  %651 = vmatprep.subr.mxu0 0.0
  %652 = vmatpush2.msra.mxu0 0.0
  %653 = vmatprep.subr.mxu0 0.0
  %654 = vmatpush2.msra.mxu0 0.0
  %655 = vmatprep.subr.mxu0 0.0
  %656 = vmatpush2.msra.mxu0 0.0
  %657 = vmatprep.subr.mxu0 0.0
  %658 = vmatpush2.msra.mxu0 0.0
  %659 = vmatprep.subr.mxu0 0.0
  %660 = vmatpush2.msra.mxu0 0.0
  %661 = vmatprep.subr.mxu0 0.0
  %662 = vmatpush2.msra.mxu0 0.0
  %663 = vmatprep.subr.mxu0 0.0
  %664 = vmatpush2.msra.mxu0 0.0
  %665 = vmatprep.subr.mxu0 0.0
  %666 = vmatpush2.msra.mxu0 0.0
  %667 = vmatprep.subr.mxu0 0.0
  %668 = vmatpush2.msra.mxu0 0.0
  %669 = vmatprep.subr.mxu0 0.0
  %670 = vmatpush2.msra.mxu0 0.0
  %671 = vmatprep.subr.mxu0 0.0
  %672 = vmatpush2.msra.mxu0 0.0
  %673 = vmatprep.subr.mxu0 0.0
  %674 = vmatpush2.msra.mxu0 0.0
  %675 = vmatprep.mubr.f32.mxu0 0.0
  %676 = vmatmul.mubr.f32.gmra.mxu0 %v609
  %v677 = vpop.f32.mrf.mxu0
  %v678 = vadd.f32 0.0, %v677
  %v679 = vpop.f32.mrf.mxu0
  %680 = vdwg.mxu0
  %v681 = vadd.f32 %v144, %v678
  %v682 = vxor.u32 %v681, 2147483648
  %v683 = vmul.f32 %v682, 1.442695
  %v684 = vpow.pop %v683
  %v685 = vadd.f32 %v684, 1.0
  %v686 = vrcp.pop %v685
  %v687 = vmul.f32 1.0, %v686
  %v688 = vadd.f32 %v678, %v239
  %690 = vrot.lane.b32.xlu0 %v688, 64
  %v691 = vpop.permute.xlu0 %690
  %v693 = vmul.f32 %v687, %v691
  %695 = vrot.lane.b32.xlu0 %v693, 64
  %v696 = vpop.permute.xlu0 %695
  %v698 = vadd.f32 %v144, %v696
  %v699 = vtanh.pop %v698
  %v700 = vsub.f32 1.0, %v687
  %702 = vrot.lane.b32.xlu0 %v699, 96
  %v703 = vpop.permute.xlu0 %702
  %v705 = vmul.f32 %v700, %v703
  %v707 = vmul.f32 %v687, %v606
  %v708 = vadd.f32 %v705, %v707
  %710 = vrot.lane.b32.xlu0 %v708, 96
  %v711 = vpop.permute.xlu0 %710
  %713 = vst.msk [vmem:[#allocation2 + $0x8] sm:$0x3] %vm265, %v711
  %v714 = vsel %vm152, %v711, 0
  %716 = vmatprep.subr.mxu0 0.0
  %717 = vmatpush1.msra.mxu0 0.0
  %718 = vmatprep.subr.mxu0 0.0
  %719 = vmatpush1.msra.mxu0 0.0
  %720 = vmatprep.subr.mxu0 0.0
  %721 = vmatpush1.msra.mxu0 0.0
  %722 = vmatprep.subr.mxu0 0.0
  %723 = vmatpush1.msra.mxu0 0.0
  %724 = vmatprep.subr.mxu0 0.0
  %725 = vmatpush1.msra.mxu0 0.0
  %726 = vmatprep.subr.mxu0 0.0
  %727 = vmatpush1.msra.mxu0 0.0
  %728 = vmatprep.subr.mxu0 0.0
  %729 = vmatpush1.msra.mxu0 0.0
  %730 = vmatprep.subr.mxu0 0.0
  %731 = vmatpush1.msra.mxu0 0.0
  %732 = vmatprep.subr.mxu0 0.0
  %733 = vmatpush1.msra.mxu0 0.0
  %734 = vmatprep.subr.mxu0 0.0
  %735 = vmatpush1.msra.mxu0 0.0
  %736 = vmatprep.subr.mxu0 0.0
  %737 = vmatpush1.msra.mxu0 0.0
  %738 = vmatprep.subr.mxu0 0.0
  %739 = vmatpush1.msra.mxu0 0.0
  %740 = vmatprep.subr.mxu0 0.0
  %741 = vmatpush1.msra.mxu0 %v150
  %742 = vmatprep.subr.mxu0 0.0
  %743 = vmatpush1.msra.mxu0 %v149
  %744 = vmatprep.subr.mxu0 0.0
  %745 = vmatpush1.msra.mxu0 %v148
  %746 = vmatprep.subr.mxu0 0.0
  %747 = vmatpush1.msra.mxu0 %v147
  %748 = vmatprep.subr.mxu0 0.0
  %749 = vmatpush2.msra.mxu0 0.0
  %750 = vmatprep.subr.mxu0 0.0
  %751 = vmatpush2.msra.mxu0 0.0
  %752 = vmatprep.subr.mxu0 0.0
  %753 = vmatpush2.msra.mxu0 0.0
  %754 = vmatprep.subr.mxu0 0.0
  %755 = vmatpush2.msra.mxu0 0.0
  %756 = vmatprep.subr.mxu0 0.0
  %757 = vmatpush2.msra.mxu0 0.0
  %758 = vmatprep.subr.mxu0 0.0
  %759 = vmatpush2.msra.mxu0 0.0
  %760 = vmatprep.subr.mxu0 0.0
  %761 = vmatpush2.msra.mxu0 0.0
  %762 = vmatprep.subr.mxu0 0.0
  %763 = vmatpush2.msra.mxu0 0.0
  %764 = vmatprep.subr.mxu0 0.0
  %765 = vmatpush2.msra.mxu0 0.0
  %766 = vmatprep.subr.mxu0 0.0
  %767 = vmatpush2.msra.mxu0 0.0
  %768 = vmatprep.subr.mxu0 0.0
  %769 = vmatpush2.msra.mxu0 0.0
  %770 = vmatprep.subr.mxu0 0.0
  %771 = vmatpush2.msra.mxu0 0.0
  %772 = vmatprep.subr.mxu0 0.0
  %773 = vmatpush2.msra.mxu0 0.0
  %774 = vmatprep.subr.mxu0 0.0
  %775 = vmatpush2.msra.mxu0 0.0
  %776 = vmatprep.subr.mxu0 0.0
  %777 = vmatpush2.msra.mxu0 0.0
  %778 = vmatprep.subr.mxu0 0.0
  %779 = vmatpush2.msra.mxu0 0.0
  %780 = vmatprep.mubr.f32.mxu0 0.0
  %781 = vmatmul.mubr.f32.gmra.mxu0 %v714
  %v782 = vpop.f32.mrf.mxu0
  %v783 = vadd.f32 0.0, %v782
  %v784 = vpop.f32.mrf.mxu0
  %785 = vdwg.mxu0
  %v787 = vrot.slane %v783, 6
  %v789 = vadd.f32 %v144, %v787
  %v790 = vxor.u32 %v789, 2147483648
  %v791 = vmul.f32 %v790, 1.442695
  %v792 = vpow.pop %v791
  %v793 = vadd.f32 %v792, 1.0
  %v794 = vrcp.pop %v793
  %v795 = vmul.f32 1.0, %v794
  %v796 = vadd.f32 %v783, %v239
  %v798 = vrot.slane %v796, 6
  %799 = vrot.lane.b32.xlu0 %v798, 64
  %v800 = vpop.permute.xlu0 %799
  %v802 = vmul.f32 %v795, %v800
  %804 = vrot.lane.b32.xlu0 %v802, 64
  %v805 = vpop.permute.xlu0 %804
  %v807 = vadd.f32 %v144, %v805
  %v808 = vtanh.pop %v807
  %v809 = vsub.f32 1.0, %v795
  %811 = vrot.lane.b32.xlu0 %v808, 96
  %v812 = vpop.permute.xlu0 %811
  %v814 = vmul.f32 %v809, %v812
  %v815 = vrot.slane %v708, 6
  %v817 = vmul.f32 %v795, %v815
  %v818 = vadd.f32 %v814, %v817
  %820 = vrot.lane.b32.xlu0 %v818, 96
  %v821 = vpop.permute.xlu0 %820
  %823 = vst.msk [vmem:[#allocation2 + $0x8] sm:$0xc] %vm376, %v821
  %v824 = vrot.slane %v818, 2
  %825 = vrot.lane.b32.xlu0 %v824, 96
  %v826 = vpop.permute.xlu0 %825
  %v827 = vsel %vm152, %v826, 0
  %829 = vmatprep.subr.mxu0 0.0
  %830 = vmatpush1.msra.mxu0 0.0
  %831 = vmatprep.subr.mxu0 0.0
  %832 = vmatpush1.msra.mxu0 0.0
  %833 = vmatprep.subr.mxu0 0.0
  %834 = vmatpush1.msra.mxu0 0.0
  %835 = vmatprep.subr.mxu0 0.0
  %836 = vmatpush1.msra.mxu0 0.0
  %837 = vmatprep.subr.mxu0 0.0
  %838 = vmatpush1.msra.mxu0 0.0
  %839 = vmatprep.subr.mxu0 0.0
  %840 = vmatpush1.msra.mxu0 0.0
  %841 = vmatprep.subr.mxu0 0.0
  %842 = vmatpush1.msra.mxu0 0.0
  %843 = vmatprep.subr.mxu0 0.0
  %844 = vmatpush1.msra.mxu0 0.0
  %845 = vmatprep.subr.mxu0 0.0
  %846 = vmatpush1.msra.mxu0 0.0
  %847 = vmatprep.subr.mxu0 0.0
  %848 = vmatpush1.msra.mxu0 0.0
  %849 = vmatprep.subr.mxu0 0.0
  %850 = vmatpush1.msra.mxu0 0.0
  %851 = vmatprep.subr.mxu0 0.0
  %852 = vmatpush1.msra.mxu0 0.0
  %853 = vmatprep.subr.mxu0 0.0
  %854 = vmatpush1.msra.mxu0 %v150
  %855 = vmatprep.subr.mxu0 0.0
  %856 = vmatpush1.msra.mxu0 %v149
  %857 = vmatprep.subr.mxu0 0.0
  %858 = vmatpush1.msra.mxu0 %v148
  %859 = vmatprep.subr.mxu0 0.0
  %860 = vmatpush1.msra.mxu0 %v147
  %861 = vmatprep.subr.mxu0 0.0
  %862 = vmatpush2.msra.mxu0 0.0
  %863 = vmatprep.subr.mxu0 0.0
  %864 = vmatpush2.msra.mxu0 0.0
  %865 = vmatprep.subr.mxu0 0.0
  %866 = vmatpush2.msra.mxu0 0.0
  %867 = vmatprep.subr.mxu0 0.0
  %868 = vmatpush2.msra.mxu0 0.0
  %869 = vmatprep.subr.mxu0 0.0
  %870 = vmatpush2.msra.mxu0 0.0
  %871 = vmatprep.subr.mxu0 0.0
  %872 = vmatpush2.msra.mxu0 0.0
  %873 = vmatprep.subr.mxu0 0.0
  %874 = vmatpush2.msra.mxu0 0.0
  %875 = vmatprep.subr.mxu0 0.0
  %876 = vmatpush2.msra.mxu0 0.0
  %877 = vmatprep.subr.mxu0 0.0
  %878 = vmatpush2.msra.mxu0 0.0
  %879 = vmatprep.subr.mxu0 0.0
  %880 = vmatpush2.msra.mxu0 0.0
  %881 = vmatprep.subr.mxu0 0.0
  %882 = vmatpush2.msra.mxu0 0.0
  %883 = vmatprep.subr.mxu0 0.0
  %884 = vmatpush2.msra.mxu0 0.0
  %885 = vmatprep.subr.mxu0 0.0
  %886 = vmatpush2.msra.mxu0 0.0
  %887 = vmatprep.subr.mxu0 0.0
  %888 = vmatpush2.msra.mxu0 0.0
  %889 = vmatprep.subr.mxu0 0.0
  %890 = vmatpush2.msra.mxu0 0.0
  %891 = vmatprep.subr.mxu0 0.0
  %892 = vmatpush2.msra.mxu0 0.0
  %893 = vmatprep.mubr.f32.mxu0 0.0
  %894 = vmatmul.mubr.f32.gmra.mxu0 %v827
  %v895 = vpop.f32.mrf.mxu0
  %v896 = vadd.f32 0.0, %v895
  %v897 = vpop.f32.mrf.mxu0
  %898 = vdwg.mxu0
  %v900 = vrot.slane %v896, 4
  %v902 = vadd.f32 %v144, %v900
  %v903 = vxor.u32 %v902, 2147483648
  %v904 = vmul.f32 %v903, 1.442695
  %v905 = vpow.pop %v904
  %v906 = vadd.f32 %v905, 1.0
  %v907 = vrcp.pop %v906
  %v908 = vmul.f32 1.0, %v907
  %v909 = vadd.f32 %v896, %v239
  %v911 = vrot.slane %v909, 4
  %912 = vrot.lane.b32.xlu0 %v911, 64
  %v913 = vpop.permute.xlu0 %912
  %v915 = vmul.f32 %v908, %v913
  %917 = vrot.lane.b32.xlu0 %v915, 64
  %v918 = vpop.permute.xlu0 %917
  %v920 = vadd.f32 %v144, %v918
  %v921 = vtanh.pop %v920
  %v922 = vsub.f32 1.0, %v908
  %924 = vrot.lane.b32.xlu0 %v921, 96
  %v925 = vpop.permute.xlu0 %924
  %v927 = vmul.f32 %v922, %v925
  %v928 = vrot.slane %v818, 6
  %v930 = vmul.f32 %v908, %v928
  %v931 = vadd.f32 %v927, %v930
  %933 = vrot.lane.b32.xlu0 %v931, 96
  %v934 = vpop.permute.xlu0 %933
  %936 = vst.msk [vmem:[#allocation2 + $0x8] sm:$0x30] %vm490, %v934
  %v937 = vrot.slane %v931, 4
  %938 = vrot.lane.b32.xlu0 %v937, 96
  %v939 = vpop.permute.xlu0 %938
  %v940 = vsel %vm152, %v939, 0
  %942 = vmatprep.subr.mxu0 0.0
  %943 = vmatpush1.msra.mxu0 0.0
  %944 = vmatprep.subr.mxu0 0.0
  %945 = vmatpush1.msra.mxu0 0.0
  %946 = vmatprep.subr.mxu0 0.0
  %947 = vmatpush1.msra.mxu0 0.0
  %948 = vmatprep.subr.mxu0 0.0
  %949 = vmatpush1.msra.mxu0 0.0
  %950 = vmatprep.subr.mxu0 0.0
  %951 = vmatpush1.msra.mxu0 0.0
  %952 = vmatprep.subr.mxu0 0.0
  %953 = vmatpush1.msra.mxu0 0.0
  %954 = vmatprep.subr.mxu0 0.0
  %955 = vmatpush1.msra.mxu0 0.0
  %956 = vmatprep.subr.mxu0 0.0
  %957 = vmatpush1.msra.mxu0 0.0
  %958 = vmatprep.subr.mxu0 0.0
  %959 = vmatpush1.msra.mxu0 0.0
  %960 = vmatprep.subr.mxu0 0.0
  %961 = vmatpush1.msra.mxu0 0.0
  %962 = vmatprep.subr.mxu0 0.0
  %963 = vmatpush1.msra.mxu0 0.0
  %964 = vmatprep.subr.mxu0 0.0
  %965 = vmatpush1.msra.mxu0 0.0
  %966 = vmatprep.subr.mxu0 0.0
  %967 = vmatpush1.msra.mxu0 %v150
  %968 = vmatprep.subr.mxu0 0.0
  %969 = vmatpush1.msra.mxu0 %v149
  %970 = vmatprep.subr.mxu0 0.0
  %971 = vmatpush1.msra.mxu0 %v148
  %972 = vmatprep.subr.mxu0 0.0
  %973 = vmatpush1.msra.mxu0 %v147
  %974 = vmatprep.subr.mxu0 0.0
  %975 = vmatpush2.msra.mxu0 0.0
  %976 = vmatprep.subr.mxu0 0.0
  %977 = vmatpush2.msra.mxu0 0.0
  %978 = vmatprep.subr.mxu0 0.0
  %979 = vmatpush2.msra.mxu0 0.0
  %980 = vmatprep.subr.mxu0 0.0
  %981 = vmatpush2.msra.mxu0 0.0
  %982 = vmatprep.subr.mxu0 0.0
  %983 = vmatpush2.msra.mxu0 0.0
  %984 = vmatprep.subr.mxu0 0.0
  %985 = vmatpush2.msra.mxu0 0.0
  %986 = vmatprep.subr.mxu0 0.0
  %987 = vmatpush2.msra.mxu0 0.0
  %988 = vmatprep.subr.mxu0 0.0
  %989 = vmatpush2.msra.mxu0 0.0
  %990 = vmatprep.subr.mxu0 0.0
  %991 = vmatpush2.msra.mxu0 0.0
  %992 = vmatprep.subr.mxu0 0.0
  %993 = vmatpush2.msra.mxu0 0.0
  %994 = vmatprep.subr.mxu0 0.0
  %995 = vmatpush2.msra.mxu0 0.0
  %996 = vmatprep.subr.mxu0 0.0
  %997 = vmatpush2.msra.mxu0 0.0
  %998 = vmatprep.subr.mxu0 0.0
  %999 = vmatpush2.msra.mxu0 0.0
  %1000 = vmatprep.subr.mxu0 0.0
  %1001 = vmatpush2.msra.mxu0 0.0
  %1002 = vmatprep.subr.mxu0 0.0
  %1003 = vmatpush2.msra.mxu0 0.0
  %1004 = vmatprep.subr.mxu0 0.0
  %1005 = vmatpush2.msra.mxu0 0.0
  %1006 = vmatprep.mubr.f32.mxu0 0.0
  %1007 = vmatmul.mubr.f32.gmra.mxu0 %v940
  %v1008 = vpop.f32.mrf.mxu0
  %v1009 = vadd.f32 0.0, %v1008
  %v1010 = vpop.f32.mrf.mxu0
  %1011 = vdwg.mxu0
  %v1013 = vrot.slane %v1009, 2
  %v1015 = vadd.f32 %v144, %v1013
  %v1016 = vxor.u32 %v1015, 2147483648
  %v1017 = vmul.f32 %v1016, 1.442695
  %v1018 = vpow.pop %v1017
  %v1019 = vadd.f32 %v1018, 1.0
  %v1020 = vrcp.pop %v1019
  %v1021 = vmul.f32 1.0, %v1020
  %v1022 = vadd.f32 %v1009, %v239
  %v1024 = vrot.slane %v1022, 2
  %1025 = vrot.lane.b32.xlu0 %v1024, 64
  %v1026 = vpop.permute.xlu0 %1025
  %v1028 = vmul.f32 %v1021, %v1026
  %1030 = vrot.lane.b32.xlu0 %v1028, 64
  %v1031 = vpop.permute.xlu0 %1030
  %v1033 = vadd.f32 %v144, %v1031
  %v1034 = vtanh.pop %v1033
  %v1035 = vsub.f32 1.0, %v1021
  %1037 = vrot.lane.b32.xlu0 %v1034, 96
  %v1038 = vpop.permute.xlu0 %1037
  %v1040 = vmul.f32 %v1035, %v1038
  %v1041 = vrot.slane %v931, 6
  %v1043 = vmul.f32 %v1021, %v1041
  %v1044 = vadd.f32 %v1040, %v1043
  %1046 = vrot.lane.b32.xlu0 %v1044, 96
  %v1047 = vpop.permute.xlu0 %1046
  %1049 = vst.msk [vmem:[#allocation2 + $0x8] sm:$0xc0] %vm604, %v1047
  %v1050 = vld [vmem:[#allocation2] sm:$0xff]
  %v1051 = vld [vmem:[#allocation2 + $0x8] sm:$0xff]
  %v1052 = vld [vmem:[%s6] sm:$0xff]
  %v1053 = vld [vmem:[%s6 + $0x8] sm:$0xff]
  %v1054 = vld [vmem:[%s6 + $0x10] sm:$0xff]
  %v1055 = vld [vmem:[%s6 + $0x18] sm:$0xff]
  %v1056 = vld [vmem:[%s6 + $0x20] sm:$0xff]
  %v1057 = vld [vmem:[%s6 + $0x28] sm:$0xff]
  %v1058 = vld [vmem:[%s6 + $0x30] sm:$0xff]
  %v1059 = vld [vmem:[%s6 + $0x38] sm:$0xff]
  %v1060 = vld [vmem:[%s7] sm:$0x3]
  %v1062 = vlaneseq
  %v1063 = vshrl.u32 %v1062, 7
  %v1064 = vsub.s32 0, %v1063
  %v1065 = vrot.slane %v1060, %v1064
  %v1066 = vlaneseq
  %v1067 = vshrl.u32 %v1066, 7
  %v1068 = vsub.s32 1, %v1067
  %v1069 = vrot.slane %v1060, %v1068
  %v1073 = vsel %vm152, %v1050, 0
  %v1076 = vsel %vm152, %v1051, 0
  %1078 = vmatprep.subr.mxu0 0.0
  %1079 = vmatpush1.msra.mxu0 0.0
  %1080 = vmatprep.subr.mxu0 0.0
  %1081 = vmatpush1.msra.mxu0 0.0
  %1082 = vmatprep.subr.mxu0 0.0
  %1083 = vmatpush1.msra.mxu0 0.0
  %1084 = vmatprep.subr.mxu0 0.0
  %1085 = vmatpush1.msra.mxu0 0.0
  %1086 = vmatprep.subr.mxu0 0.0
  %1087 = vmatpush1.msra.mxu0 0.0
  %1088 = vmatprep.subr.mxu0 0.0
  %1089 = vmatpush1.msra.mxu0 0.0
  %1090 = vmatprep.subr.mxu0 0.0
  %1091 = vmatpush1.msra.mxu0 0.0
  %1092 = vmatprep.subr.mxu0 0.0
  %1093 = vmatpush1.msra.mxu0 0.0
  %1094 = vmatprep.subr.mxu0 0.0
  %1095 = vmatpush1.msra.mxu0 0.0
  %1096 = vmatprep.subr.mxu0 0.0
  %1097 = vmatpush1.msra.mxu0 0.0
  %1098 = vmatprep.subr.mxu0 0.0
  %1099 = vmatpush1.msra.mxu0 0.0
  %1100 = vmatprep.subr.mxu0 0.0
  %1101 = vmatpush1.msra.mxu0 0.0
  %1102 = vmatprep.subr.mxu0 %v1059
  %1103 = vmatpush1.msra.mxu0 %v1058
  %1104 = vmatprep.subr.mxu0 %v1057
  %1105 = vmatpush1.msra.mxu0 %v1056
  %1106 = vmatprep.subr.mxu0 %v1055
  %1107 = vmatpush1.msra.mxu0 %v1054
  %1108 = vmatprep.subr.mxu0 %v1053
  %1109 = vmatpush1.msra.mxu0 %v1052
  %1110 = vmatprep.subr.mxu0 0.0
  %1111 = vmatpush2.msra.mxu0 0.0
  %1112 = vmatprep.subr.mxu0 0.0
  %1113 = vmatpush2.msra.mxu0 0.0
  %1114 = vmatprep.subr.mxu0 0.0
  %1115 = vmatpush2.msra.mxu0 0.0
  %1116 = vmatprep.subr.mxu0 0.0
  %1117 = vmatpush2.msra.mxu0 0.0
  %1118 = vmatprep.subr.mxu0 0.0
  %1119 = vmatpush2.msra.mxu0 0.0
  %1120 = vmatprep.subr.mxu0 0.0
  %1121 = vmatpush2.msra.mxu0 0.0
  %1122 = vmatprep.subr.mxu0 0.0
  %1123 = vmatpush2.msra.mxu0 0.0
  %1124 = vmatprep.subr.mxu0 0.0
  %1125 = vmatpush2.msra.mxu0 0.0
  %1126 = vmatprep.subr.mxu0 0.0
  %1127 = vmatpush2.msra.mxu0 0.0
  %1128 = vmatprep.subr.mxu0 0.0
  %1129 = vmatpush2.msra.mxu0 0.0
  %1130 = vmatprep.subr.mxu0 0.0
  %1131 = vmatpush2.msra.mxu0 0.0
  %1132 = vmatprep.subr.mxu0 0.0
  %1133 = vmatpush2.msra.mxu0 0.0
  %1134 = vmatprep.subr.mxu0 0.0
  %1135 = vmatpush2.msra.mxu0 0.0
  %1136 = vmatprep.subr.mxu0 0.0
  %1137 = vmatpush2.msra.mxu0 0.0
  %1138 = vmatprep.subr.mxu0 0.0
  %1139 = vmatpush2.msra.mxu0 0.0
  %1140 = vmatprep.subr.mxu0 0.0
  %1141 = vmatpush2.msra.mxu0 0.0
  %1142 = vmatprep.mubr.f32.mxu0 0.0
  %1143 = vmatmul.mubr.f32.gmra.mxu0 %v1073
  %v1144 = vpop.f32.mrf.mxu0
  %v1145 = vadd.f32 %v1065, %v1144
  %v1146 = vpop.f32.mrf.mxu0
  %v1147 = vadd.f32 %v1069, %v1146
  %1148 = vmatprep.mubr.f32.mxu0 0.0
  %1149 = vmatmul.mubr.f32.gmra.mxu0 %v1076
  %v1150 = vpop.f32.mrf.mxu0
  %v1151 = vadd.f32 %v1065, %v1150
  %v1152 = vpop.f32.mrf.mxu0
  %v1153 = vadd.f32 %v1069, %v1152
  %1154 = vdwg.mxu0
  %v1155 = vlaneseq
  %v1156 = vand.u32 %v1155, 127
  %v1157 = vadd.s32 %v1156, 128
  %vm1158 = vcmp.lt.s32.totalorder %v1156, 160
  %vm1159 = vcmp.lt.s32.totalorder %v1157, 160
  %v1160 = vmax.f32 %v1145, 0.0
  %v1161 = vmax.f32 %v1147, 0.0
  %v1162 = vmax.f32 %v1151, 0.0
  %v1163 = vmax.f32 %v1153, 0.0
  %v1164 = vsel %vm1158, %v1160, %v1145
  %v1165 = vsel %vm1159, %v1161, %v1147
  %v1166 = vsel %vm1158, %v1162, %v1151
  %v1167 = vsel %vm1159, %v1163, %v1153
  %v1168 = vld [vmem:[%s8] sm:$0xff]
  %v1169 = vld [vmem:[%s8 + $0x8] sm:$0xff]
  %v1170 = vld [vmem:[%s8 + $0x10] sm:$0xff]
  %v1171 = vld [vmem:[%s8 + $0x18] sm:$0xff]
  %v1172 = vld [vmem:[%s8 + $0x20] sm:$0xff]
  %v1173 = vld [vmem:[%s8 + $0x28] sm:$0xff]
  %v1174 = vld [vmem:[%s8 + $0x30] sm:$0xff]
  %v1175 = vld [vmem:[%s8 + $0x38] sm:$0xff]
  %v1176 = vld [vmem:[%s8 + $0x40] sm:$0xff]
  %v1177 = vld [vmem:[%s8 + $0x48] sm:$0xff]
  %v1178 = vld [vmem:[%s8 + $0x50] sm:$0xff]
  %v1179 = vld [vmem:[%s8 + $0x58] sm:$0xff]
  %v1180 = vld [vmem:[%s8 + $0x60] sm:$0xff]
  %v1181 = vld [vmem:[%s8 + $0x68] sm:$0xff]
  %v1182 = vld [vmem:[%s8 + $0x70] sm:$0xff]
  %v1183 = vld [vmem:[%s8 + $0x78] sm:$0xff]
  %v1184 = vld [vmem:[%s8 + $0x80] sm:$0xff]
  %v1185 = vld [vmem:[%s8 + $0x88] sm:$0xff]
  %v1186 = vld [vmem:[%s8 + $0x90] sm:$0xff]
  %v1187 = vld [vmem:[%s8 + $0x98] sm:$0xff]
  %v1188 = vld [vmem:[%s8 + $0xa0] sm:$0xff]
  %v1189 = vld [vmem:[%s8 + $0xa8] sm:$0xff]
  %v1190 = vld [vmem:[%s8 + $0xb0] sm:$0xff]
  %v1191 = vld [vmem:[%s8 + $0xb8] sm:$0xff]
  %v1192 = vld [vmem:[%s9] sm:$0x1]
  %v1194 = vlaneseq
  %v1195 = vshrl.u32 %v1194, 7
  %v1196 = vsub.s32 0, %v1195
  %v1197 = vrot.slane %v1192, %v1196
  %vm1199 = vcmask 523264
  %v1201 = vsel %vm1199, %v1165, 0
  %v1204 = vsel %vm1199, %v1167, 0
  %1206 = vmatprep.subr.mxu0 0.0
  %1207 = vmatpush1.msra.mxu0 %v1183
  %1208 = vmatprep.subr.mxu0 0.0
  %1209 = vmatpush1.msra.mxu0 %v1182
  %1210 = vmatprep.subr.mxu0 0.0
  %1211 = vmatpush1.msra.mxu0 %v1181
  %1212 = vmatprep.subr.mxu0 0.0
  %1213 = vmatpush1.msra.mxu0 %v1180
  %1214 = vmatprep.subr.mxu0 0.0
  %1215 = vmatpush1.msra.mxu0 %v1179
  %1216 = vmatprep.subr.mxu0 0.0
  %1217 = vmatpush1.msra.mxu0 %v1178
  %1218 = vmatprep.subr.mxu0 0.0
  %1219 = vmatpush1.msra.mxu0 %v1177
  %1220 = vmatprep.subr.mxu0 0.0
  %1221 = vmatpush1.msra.mxu0 %v1176
  %1222 = vmatprep.subr.mxu0 0.0
  %1223 = vmatpush1.msra.mxu0 %v1175
  %1224 = vmatprep.subr.mxu0 0.0
  %1225 = vmatpush1.msra.mxu0 %v1174
  %1226 = vmatprep.subr.mxu0 0.0
  %1227 = vmatpush1.msra.mxu0 %v1173
  %1228 = vmatprep.subr.mxu0 0.0
  %1229 = vmatpush1.msra.mxu0 %v1172
  %1230 = vmatprep.subr.mxu0 0.0
  %1231 = vmatpush1.msra.mxu0 %v1171
  %1232 = vmatprep.subr.mxu0 0.0
  %1233 = vmatpush1.msra.mxu0 %v1170
  %1234 = vmatprep.subr.mxu0 0.0
  %1235 = vmatpush1.msra.mxu0 %v1169
  %1236 = vmatprep.subr.mxu0 0.0
  %1237 = vmatpush1.msra.mxu0 %v1168
  %1238 = vmatprep.subr.mxu0 0.0
  %1239 = vmatpush2.msra.mxu0 0.0
  %1240 = vmatprep.subr.mxu0 0.0
  %1241 = vmatpush2.msra.mxu0 0.0
  %1242 = vmatprep.subr.mxu0 0.0
  %1243 = vmatpush2.msra.mxu0 0.0
  %1244 = vmatprep.subr.mxu0 0.0
  %1245 = vmatpush2.msra.mxu0 0.0
  %1246 = vmatprep.subr.mxu0 0.0
  %1247 = vmatpush2.msra.mxu0 0.0
  %1248 = vmatprep.subr.mxu0 0.0
  %1249 = vmatpush2.msra.mxu0 0.0
  %1250 = vmatprep.subr.mxu0 0.0
  %1251 = vmatpush2.msra.mxu0 0.0
  %1252 = vmatprep.subr.mxu0 0.0
  %1253 = vmatpush2.msra.mxu0 0.0
  %1254 = vmatprep.subr.mxu0 0.0
  %1255 = vmatpush2.msra.mxu0 %v1191
  %1256 = vmatprep.subr.mxu0 0.0
  %1257 = vmatpush2.msra.mxu0 %v1190
  %1258 = vmatprep.subr.mxu0 0.0
  %1259 = vmatpush2.msra.mxu0 %v1189
  %1260 = vmatprep.subr.mxu0 0.0
  %1261 = vmatpush2.msra.mxu0 %v1188
  %1262 = vmatprep.subr.mxu0 0.0
  %1263 = vmatpush2.msra.mxu0 %v1187
  %1264 = vmatprep.subr.mxu0 0.0
  %1265 = vmatpush2.msra.mxu0 %v1186
  %1266 = vmatprep.subr.mxu0 0.0
  %1267 = vmatpush2.msra.mxu0 %v1185
  %1268 = vmatprep.subr.mxu0 0.0
  %1269 = vmatpush2.msra.mxu0 %v1184
  %1270 = vmatprep.mubr.f32.mxu0 %v1201
  %1271 = vmatmul.mubr.f32.gmra.mxu0 %v1164
  %v1272 = vpop.f32.mrf.mxu0
  %v1273 = vadd.f32 %v1197, %v1272
  %v1274 = vpop.f32.mrf.mxu0
  %1275 = vmatprep.mubr.f32.mxu0 %v1204
  %1276 = vmatmul.mubr.f32.gmra.mxu0 %v1166
  %v1277 = vpop.f32.mrf.mxu0
  %v1278 = vadd.f32 %v1197, %v1277
  %v1279 = vpop.f32.mrf.mxu0
  %1280 = vdwg.mxu0
  %v1281 = vld [vmem:[%s1] sm:$0xff]
  %v1282 = vld [vmem:[%s1 + $0x8] sm:$0xff]
  %v1283 = vld [vmem:[%s10] sm:$0x1]
  %1285 = vset.pattern.permute.xlu0 0
  %1286 = vperm.xlu0 %1285, %v1281
  %v1287 = vpop.permute.xlu0 %1286
  %1290 = vset.pattern.permute.xlu0 0
  %1291 = vperm.xlu0 %1290, %v1282
  %v1292 = vpop.permute.xlu0 %1291
  %v1295 = vlaneseq
  %v1296 = vshrl.u32 %v1295, 7
  %v1297 = vsub.s32 0, %v1296
  %v1298 = vrot.slane %v1283, %v1297
  %v1300 = vmul.f32 %v1287, %v1298
  %v1301 = vmul.f32 %v1292, %v1298
  %v1302 = vld [vmem:[%s11] sm:$0x1]
  %v1304 = vlaneseq
  %v1305 = vshrl.u32 %v1304, 7
  %v1306 = vsub.s32 0, %v1305
  %v1307 = vrot.slane %v1302, %v1306
  %v1309 = vsub.f32 %v1300, %v1307
  %v1310 = vsub.f32 %v1301, %v1307
  %v1311 = vld [vmem:[%s12] sm:$0x1]
  %v1312 = vmul.f32 %v1309, 0.5
  %v1313 = vmul.f32 %v1310, 0.5
  %v1314 = vmul.f32 %v1312, %v1309
  %v1315 = vmul.f32 %v1313, %v1310
  %v1317 = vlaneseq
  %v1318 = vshrl.u32 %v1317, 7
  %v1319 = vsub.s32 0, %v1318
  %v1320 = vrot.slane %v1311, %v1319
  %v1322 = vsub.f32 %v1320, %v1314
  %v1323 = vsub.f32 %v1320, %v1315
  %v1324 = vadd.f32 %v1273, %v1322
  %v1325 = vadd.f32 %v1278, %v1323
  %vm1326 = vcmask 162816
  %v1327 = vsel %vm1326, %v1324, -inf
  %1328 = vmax.xlane.f32.xlu0 %v1327
  %v1329 = vpop.xlane.xlu0 %1328
  %v1330 = vsel %vm1326, %v1325, -inf
  %1331 = vmax.xlane.f32.xlu0 %v1330
  %v1332 = vpop.xlane.xlu0 %1331
  %v1333 = vsub.f32 %v1324, %v1329
  %v1334 = vsub.f32 %v1325, %v1332
  %v1335 = vmul.f32 %v1333, 1.442695
  %v1336 = vpow.pop %v1335
  %v1337 = vmul.f32 %v1334, 1.442695
  %v1338 = vpow.pop %v1337
  %v1339 = vld [vmem:[%s13] sm:$0xff]
  %v1340 = vld [vmem:[%s13 + $0x8] sm:$0xff]
  %v1341 = vld [vmem:[%s13 + $0x10] sm:$0xf]
  %v1343 = vsel %vm1326, %v1336, 0
  %v1346 = vsel %vm1326, %v1338, 0
  %vm1348 = vcmask 1043456
  %v1350 = vsel %vm1348, %v1341, 0
  %1352 = vmatprep.subr.mxu0 0.0
  %1353 = vmatpush1.msra.mxu0 0.0
  %1354 = vmatprep.subr.mxu0 0.0
  %1355 = vmatpush1.msra.mxu0 0.0
  %1356 = vmatprep.subr.mxu0 0.0
  %1357 = vmatpush1.msra.mxu0 0.0
  %1358 = vmatprep.subr.mxu0 0.0
  %1359 = vmatpush1.msra.mxu0 0.0
  %1360 = vmatprep.subr.mxu0 0.0
  %1361 = vmatpush1.msra.mxu0 0.0
  %1362 = vmatprep.subr.mxu0 0.0
  %1363 = vmatpush1.msra.mxu0 0.0
  %1364 = vmatprep.subr.mxu0 0.0
  %1365 = vmatpush1.msra.mxu0 0.0
  %1366 = vmatprep.subr.mxu0 0.0
  %1367 = vmatpush1.msra.mxu0 0.0
  %1368 = vmatprep.subr.mxu0 0.0
  %1369 = vmatpush1.msra.mxu0 0.0
  %1370 = vmatprep.subr.mxu0 0.0
  %1371 = vmatpush1.msra.mxu0 0.0
  %1372 = vmatprep.subr.mxu0 0.0
  %1373 = vmatpush1.msra.mxu0 0.0
  %1374 = vmatprep.subr.mxu0 0.0
  %1375 = vmatpush1.msra.mxu0 0.0
  %1376 = vmatprep.subr.mxu0 0.0
  %1377 = vmatpush1.msra.mxu0 0.0
  %1378 = vmatprep.subr.mxu0 0.0
  %1379 = vmatpush1.msra.mxu0 %v1350
  %1380 = vmatprep.subr.mxu0 0.0
  %1381 = vmatpush1.msra.mxu0 %v1340
  %1382 = vmatprep.subr.mxu0 0.0
  %1383 = vmatpush1.msra.mxu0 %v1339
  %1384 = vmatprep.subr.mxu0 0.0
  %1385 = vmatpush2.msra.mxu0 0.0
  %1386 = vmatprep.subr.mxu0 0.0
  %1387 = vmatpush2.msra.mxu0 0.0
  %1388 = vmatprep.subr.mxu0 0.0
  %1389 = vmatpush2.msra.mxu0 0.0
  %1390 = vmatprep.subr.mxu0 0.0
  %1391 = vmatpush2.msra.mxu0 0.0
  %1392 = vmatprep.subr.mxu0 0.0
  %1393 = vmatpush2.msra.mxu0 0.0
  %1394 = vmatprep.subr.mxu0 0.0
  %1395 = vmatpush2.msra.mxu0 0.0
  %1396 = vmatprep.subr.mxu0 0.0
  %1397 = vmatpush2.msra.mxu0 0.0
  %1398 = vmatprep.subr.mxu0 0.0
  %1399 = vmatpush2.msra.mxu0 0.0
  %1400 = vmatprep.subr.mxu0 0.0
  %1401 = vmatpush2.msra.mxu0 0.0
  %1402 = vmatprep.subr.mxu0 0.0
  %1403 = vmatpush2.msra.mxu0 0.0
  %1404 = vmatprep.subr.mxu0 0.0
  %1405 = vmatpush2.msra.mxu0 0.0
  %1406 = vmatprep.subr.mxu0 0.0
  %1407 = vmatpush2.msra.mxu0 0.0
  %1408 = vmatprep.subr.mxu0 0.0
  %1409 = vmatpush2.msra.mxu0 0.0
  %1410 = vmatprep.subr.mxu0 0.0
  %1411 = vmatpush2.msra.mxu0 0.0
  %1412 = vmatprep.subr.mxu0 0.0
  %1413 = vmatpush2.msra.mxu0 0.0
  %1414 = vmatprep.subr.mxu0 0.0
  %1415 = vmatpush2.msra.mxu0 0.0
  %1416 = vmatprep.mubr.f32.mxu0 0.0
  %1417 = vmatmul.mubr.f32.gmra.mxu0 %v1343
  %v1418 = vpop.f32.mrf.mxu0
  %v1419 = vadd.f32 0.0, %v1418
  %v1420 = vpop.f32.mrf.mxu0
  %1421 = vmatprep.mubr.f32.mxu0 0.0
  %1422 = vmatmul.mubr.f32.gmra.mxu0 %v1346
  %v1423 = vpop.f32.mrf.mxu0
  %v1424 = vadd.f32 0.0, %v1423
  %v1425 = vpop.f32.mrf.mxu0
  %1426 = vdwg.mxu0
  %v1427 = vlog2.pop %v1419
  %v1428 = vmul.f32 %v1427, 0.6931472
  %v1429 = vlog2.pop %v1424
  %v1430 = vmul.f32 %v1429, 0.6931472
  %v1431 = vadd.f32 %v1428, %v1329
  %v1432 = vadd.f32 %v1430, %v1332
  %1435 = vrot.lane.b32.xlu0 %v1431, 20
  %v1436 = vpop.permute.xlu0 %1435
  %1437 = vrot.lane.b32.xlu0 %v1432, 20
  %v1438 = vpop.permute.xlu0 %1437
  %v1441 = vsel %vm1326, %v1273, %v1436
  %v1442 = vsel %vm1326, %v1278, %v1438
  %vm1443 = vcmask 195584
  %v1444 = vsel %vm1443, %v1441, 0.0
  %v1445 = vsel %vm1443, %v1442, 0.0
  %1446 = vst [vmem:[%s14] sm:$0xff] %v1444
  %1447 = vst [vmem:[%s14 + $0x8] sm:$0xff] %v1445
  // Predicated region
  $region58: #{erpp_forward.1} parent=0 // pred_check
    _
  $region59: #{erpp_forward.1} parent=0 // pred_check_branch
    %1449 = sbr.rel (0) target = $region61
  $region60: #{erpp_forward.1} parent=0 // pred_region
    _
  $region61: #{erpp_forward.1} parent=0 // pred_fallthru
    _
  // Predicated region
  $region62: #{erpp_forward.1} parent=0 // pred_check
    _
  $region63: #{erpp_forward.1} parent=0 // pred_check_branch
    %1451 = sbr.rel (0) target = $region65
  $region64: #{erpp_forward.1} parent=0 // pred_region
    _
  $region65: #{erpp_forward.1} parent=0 // pred_fallthru
    _

</llo_original>
